<compile_context>
chip_gen: v7x
topology: tpu7x:2x2x1
jax: 0.10.0
libtpu: 0.0.40
codegen_flags: <defaults>
</compile_context>

<pallas_src>
import functools

import jax
import jax.numpy as jnp
from jax import lax
from jax.experimental import pallas as pl
from jax.experimental.pallas import tpu as pltpu


def _round_up(n, m):
    return ((n + m - 1) // m) * m


def _lstm_kernel(x_ref, wx_ref, wh_ref, b_ref, wo_ref, bo_ref, out_ref, zx_ref,
                 *, seq, bp, hp):
    """Shapes (padded, lane/sublane aligned):
      x_ref : (seq*bp, I)     bf16  time-major flattened input
      wx_ref: (I, 4*hp)       bf16    wh_ref: (hp, 4*hp) bf16
      b_ref : (1, 4*hp)       f32   combined LSTM bias (zeros at init)
      wo_ref: (hp, op)        bf16    bo_ref: (1, op) f32
      out_ref: (bp, op)       f32
      zx_ref: (seq, bp, 4*hp) f32   VMEM scratch holding the hoisted x-projection.
    hp/op are multiples of 128 and bp a multiple of 8, so every slice below is
    tile-aligned."""

    # ---- Hoisted input projection + bias: one MXU matmul covering all time
    #      steps, off the serial recurrence.  The reshape only regroups whole
    #      8-row sublane blocks (bp == 8*k), so it stays tile-aligned. ----
    zxs = (jnp.dot(x_ref[...], wx_ref[...], preferred_element_type=jnp.float32)
           + b_ref[...])
    zx_ref[...] = zxs.reshape(seq, bp, 4 * hp)

    h0 = jnp.zeros((bp, hp), jnp.float32)
    c0 = jnp.zeros((bp, hp), jnp.float32)

    def step(t, carry):
        h, c = carry
        zx = zx_ref[t]                                    # (bp, 4*hp), aligned
        # Recurrent matmul: bf16 operands, f32 accumulate.  wh is invariant
        # across the (fully unrolled) steps so Mosaic can reuse its RHS feed.
        # TODO(synk): at production hp, hold the RHS explicitly across steps
        # via pltpu.matmul_push_rhs / matmul_acc_lhs / matmul_pop.
        z = zx + jnp.dot(h.astype(jnp.bfloat16), wh_ref[...],
                         preferred_element_type=jnp.float32)
        # [i, f, o] are lane-adjacent by construction -> one EUP launch.
        sig = jax.nn.sigmoid(z[:, 0:3 * hp])
        i_t = sig[:, 0 * hp:1 * hp]
        f_t = sig[:, 1 * hp:2 * hp]
        o_t = sig[:, 2 * hp:3 * hp]
        g_t = jnp.tanh(z[:, 3 * hp:4 * hp])
        c = f_t * c + i_t * g_t
        h = o_t * jnp.tanh(c)
        # TODO(synk): dropout is identity for dropout_rate=0.0 (module default).
        return (h, c)

    # h/c live in vregs across the short recurrence; seq is small and static,
    # so a full unroll keeps MXU/EUP/VPU work of adjacent steps overlappable.
    # TODO(synk): cap unroll to 2-4 at production seq/hp to avoid vreg spills.
    h, _ = lax.fori_loop(0, seq, step, (h0, c0), unroll=True)

    # Final Linear: lane-dense padded store (sliced back in the wrapper).
    out_ref[...] = (jnp.dot(h.astype(jnp.bfloat16), wo_ref[...],
                            preferred_element_type=jnp.float32)
                    + bo_ref[...]).astype(out_ref.dtype)


def custom_lstm_forward(x, params):
    """x: (bs, seq, input_size) float32.  Returns (bs, output_size) float32."""
    bs, seq, in_size = x.shape
    wx, wh, b = params["wx"], params["wh"], params["b"]
    wo, bo = params["wo"], params["bo"]
    hp = wh.shape[0]
    op = wo.shape[1]
    out_size = params["output_size"]
    bp = _round_up(max(bs, 8), 8)       # f32 sublane tile -> aligned zx slabs

    # Pad batch to bp (padded rows are zero; the recurrence is row-independent,
    # so they never touch real rows) and flatten time-major so each step's zx
    # slab is one contiguous, 8-aligned sublane block.
    # TODO(synk): for production shapes do this flatten/pad once at data-prep
    # time (or via a BlockSpec index_map over a seq grid) instead of a wrapper op.
    xp = jnp.pad(x, ((0, bp - bs), (0, 0), (0, 0)))
    x2 = jnp.transpose(xp, (1, 0, 2)).reshape(seq * bp, in_size)
    x2 = x2.astype(jnp.bfloat16)

    kernel = functools.partial(_lstm_kernel, seq=seq, bp=bp, hp=hp)
    vmem = pl.BlockSpec(memory_space=pltpu.MemorySpace.VMEM)

    out_p = pl.pallas_call(
        kernel,
        out_shape=jax.ShapeDtypeStruct((bp, op), jnp.float32),
        in_specs=[vmem] * 6,
        out_specs=vmem,
        scratch_shapes=[
            pltpu.VMEM((seq, bp, 4 * hp), jnp.float32),   # hoisted x-projection
        ],
    )(x2, wx, wh, b, wo, bo)
    # TODO(synk): at production sizes add a parallel batch grid axis (2nd TC on
    # v7x), stream zx per seq block under v7x's 64 MiB VMEM, and set
    # pltpu.CompilerParams(vmem_limit_bytes=...) explicitly.
    return out_p[:bs, :out_size]


def _xavier_uniform(key, shape):
    fan_out, fan_in = shape
    limit = (6.0 / (fan_in + fan_out)) ** 0.5
    return jax.random.uniform(key, shape, jnp.float32, -limit, limit)


def init_params(key, input_size, hidden_size, output_size):
    """Mirrors the module's init_weights: xavier_uniform for 2-D weights, zeros
    for biases.  Kernel weights are pre-transposed, gate-concatenated [i,f,o,g],
    zero-padded so hidden/output dims are multiples of 128, and cast to bf16
    (MXU-native); biases stay f32."""
    keys = jax.random.split(key, 9)
    W_ii = _xavier_uniform(keys[0], (hidden_size, input_size))
    W_if = _xavier_uniform(keys[1], (hidden_size, input_size))
    W_io = _xavier_uniform(keys[2], (hidden_size, input_size))
    W_ig = _xavier_uniform(keys[3], (hidden_size, input_size))
    W_hi = _xavier_uniform(keys[4], (hidden_size, hidden_size))
    W_hf = _xavier_uniform(keys[5], (hidden_size, hidden_size))
    W_ho = _xavier_uniform(keys[6], (hidden_size, hidden_size))
    W_hg = _xavier_uniform(keys[7], (hidden_size, hidden_size))
    W_lin = _xavier_uniform(keys[8], (output_size, hidden_size))
    b_lin = jnp.zeros((1, output_size), jnp.float32)

    hp = _round_up(hidden_size, 128)    # padded hidden (lane-aligned gates)
    op = _round_up(output_size, 128)    # padded output (lane-dense store)

    def pad_rows(w):                    # (H, I) -> (hp, I)
        return jnp.pad(w, ((0, hp - w.shape[0]), (0, 0)))

    def pad_hh(w):                      # (H, H) -> (hp, hp)
        return jnp.pad(w, ((0, hp - w.shape[0]), (0, hp - w.shape[1])))

    wx = jnp.concatenate([pad_rows(W_ii), pad_rows(W_if),
                          pad_rows(W_io), pad_rows(W_ig)],
                         axis=0).T.astype(jnp.bfloat16)          # (I, 4hp)
    wh = jnp.concatenate([pad_hh(W_hi), pad_hh(W_hf),
                          pad_hh(W_ho), pad_hh(W_hg)],
                         axis=0).T.astype(jnp.bfloat16)          # (hp, 4hp)
    # All LSTM biases (b_i* + b_h*) are zero-initialised -> combined bias is 0.
    # NOTE: any checkpoint-loading path must zero-pad b/bo the same way so the
    # padded-lane == 0 invariant keeps holding.
    b = jnp.zeros((1, 4 * hp), jnp.float32)

    wo = jnp.pad(W_lin, ((0, op - output_size),
                         (0, hp - hidden_size))).T.astype(jnp.bfloat16)  # (hp, op)
    bo = jnp.zeros((1, op), jnp.float32)

    raw = dict(W_ii=W_ii, W_if=W_if, W_io=W_io, W_ig=W_ig,
               W_hi=W_hi, W_hf=W_hf, W_ho=W_ho, W_hg=W_hg,
               W_lin=W_lin, b_lin=b_lin)
    return {"wx": wx, "wh": wh, "b": b, "wo": wo, "bo": bo,
            "output_size": output_size, "raw": raw}


def reference_forward(x, params):
    """Pure-JAX (f32) mirror of the PyTorch forward for verification."""
    raw = params["raw"]
    bs, seq, _ = x.shape
    H = raw["W_hi"].shape[0]
    h = jnp.zeros((bs, H), jnp.float32)
    c = jnp.zeros((bs, H), jnp.float32)
    for t in range(seq):
        xt = x[:, t, :]
        i = jax.nn.sigmoid(xt @ raw["W_ii"].T + h @ raw["W_hi"].T)
        f = jax.nn.sigmoid(xt @ raw["W_if"].T + h @ raw["W_hf"].T)
        o = jax.nn.sigmoid(xt @ raw["W_io"].T + h @ raw["W_ho"].T)
        g = jnp.tanh(xt @ raw["W_ig"].T + h @ raw["W_hg"].T)
        c = f * c + i * g
        h = o * jnp.tanh(c)
    return h @ raw["W_lin"].T + raw["b_lin"]


if __name__ == "__main__":
    batch, seq_len, input_size, hidden_size, output_size = 4, 8, 16, 32, 8

    key = jax.random.PRNGKey(0)
    k_x, k_p = jax.random.split(key)
    x = jax.random.normal(k_x, (batch, seq_len, input_size), jnp.float32)
    params = init_params(k_p, input_size, hidden_size, output_size)

    out = custom_lstm_forward(x, params)
    out = jax.block_until_ready(out)

    ref = reference_forward(x, params)
    assert out.shape == (batch, output_size)
    # bf16 MXU operands (with f32 accumulation) vs the pure-f32 reference.
    assert jnp.allclose(out, ref, atol=5e-2, rtol=5e-2), "mismatch vs reference"

    print("KERNEL_OK")
</pallas_src>

<mosaic_0001>
module attributes {stable_mosaic.version = 11 : i64} {
  func.func @_lstm_kernel(%arg0: memref<64x16xbf16, #tpu.memory_space<vmem>>, %arg1: memref<16x512xbf16, #tpu.memory_space<vmem>>, %arg2: memref<128x512xbf16, #tpu.memory_space<vmem>>, %arg3: memref<1x512xf32, #tpu.memory_space<vmem>>, %arg4: memref<128x128xbf16, #tpu.memory_space<vmem>>, %arg5: memref<1x128xf32, #tpu.memory_space<vmem>>, %arg6: memref<8x128xf32, #tpu.memory_space<vmem>>, %arg7: memref<8x8x512xf32, #tpu.memory_space<vmem>>) attributes {dimension_semantics = [], scalar_prefetch = 0 : i64, scratch_operands = 1 : i64, tpu.core_type = #tpu.core_type<tc>} {
    %c0 = arith.constant 0 : index
    %c0_0 = arith.constant 0 : index
    %0 = vector.load %arg0[%c0, %c0_0] : memref<64x16xbf16, #tpu.memory_space<vmem>>, vector<64x16xbf16>
    %c0_1 = arith.constant 0 : index
    %c0_2 = arith.constant 0 : index
    %1 = vector.load %arg1[%c0_1, %c0_2] : memref<16x512xbf16, #tpu.memory_space<vmem>>, vector<16x512xbf16>
    %cst = arith.constant dense<0.000000e+00> : vector<64x512xf32>
    %2 = tpu.matmul %0, %1, %cst {dimension_numbers = #tpu.dot_dimension_numbers<[1], [0], [0], [1], [0, 0, 1, 1], [], []>} : vector<64x16xbf16>, vector<16x512xbf16>, vector<64x512xf32> -> vector<64x512xf32>
    %c0_3 = arith.constant 0 : index
    %c0_4 = arith.constant 0 : index
    %3 = vector.load %arg3[%c0_3, %c0_4] : memref<1x512xf32, #tpu.memory_space<vmem>>, vector<1x512xf32>
    %4 = vector.broadcast %3 : vector<1x512xf32> to vector<64x512xf32>
    %5 = arith.addf %2, %4 : vector<64x512xf32>
    %6 = vector.shape_cast %5 : vector<64x512xf32> to vector<8x8x512xf32>
    %c0_5 = arith.constant 0 : index
    %c0_6 = arith.constant 0 : index
    %c0_7 = arith.constant 0 : index
    %7 = vector.load %arg7[%c0_5, %c0_6, %c0_7] : memref<8x8x512xf32, #tpu.memory_space<vmem>>, vector<8x8x512xf32>
    tpu.vector_store %arg7[%c0_5, %c0_6, %c0_7], %6 {strides = array<i32>} : memref<8x8x512xf32, #tpu.memory_space<vmem>>, vector<8x8x512xf32>,
    %cst_8 = arith.constant 0.000000e+00 : f32
    %8 = vector.broadcast %cst_8 : f32 to vector<8x128xf32>
    %cst_9 = arith.constant 0.000000e+00 : f32
    %9 = vector.broadcast %cst_9 : f32 to vector<8x128xf32>
    %c0_i32 = arith.constant 0 : i32
    %10 = arith.index_cast %c0_i32 : i32 to index
    %c0_10 = arith.constant 0 : index
    %c0_11 = arith.constant 0 : index
    %11 = vector.load %arg7[%10, %c0_10, %c0_11] : memref<8x8x512xf32, #tpu.memory_space<vmem>>, vector<1x8x512xf32>
    %12 = vector.shape_cast %11 : vector<1x8x512xf32> to vector<8x512xf32>
    %13 = arith.truncf %8 : vector<8x128xf32> to vector<8x128xbf16>
    %c0_12 = arith.constant 0 : index
    %c0_13 = arith.constant 0 : index
    %14 = vector.load %arg2[%c0_12, %c0_13] : memref<128x512xbf16, #tpu.memory_space<vmem>>, vector<128x512xbf16>
    %cst_14 = arith.constant dense<0.000000e+00> : vector<8x512xf32>
    %15 = tpu.matmul %13, %14, %cst_14 {dimension_numbers = #tpu.dot_dimension_numbers<[1], [0], [0], [1], [0, 0, 1, 1], [], []>} : vector<8x128xbf16>, vector<128x512xbf16>, vector<8x512xf32> -> vector<8x512xf32>
    %16 = arith.addf %12, %15 : vector<8x512xf32>
    %17 = vector.extract_strided_slice %16 {offsets = [0, 0], sizes = [8, 384], strides = [1, 1]} : vector<8x512xf32> to vector<8x384xf32>
    %18 = arith.negf %17 : vector<8x384xf32>
    %19 = math.exp %18 : vector<8x384xf32>
    %cst_15 = arith.constant 1.000000e+00 : f32
    %20 = vector.broadcast %cst_15 : f32 to vector<8x384xf32>
    %21 = arith.addf %20, %19 : vector<8x384xf32>
    %22 = arith.divf %20, %21 : vector<8x384xf32>
    %23 = vector.extract_strided_slice %22 {offsets = [0, 0], sizes = [8, 128], strides = [1, 1]} : vector<8x384xf32> to vector<8x128xf32>
    %24 = vector.extract_strided_slice %22 {offsets = [0, 128], sizes = [8, 128], strides = [1, 1]} : vector<8x384xf32> to vector<8x128xf32>
    %25 = vector.extract_strided_slice %22 {offsets = [0, 256], sizes = [8, 128], strides = [1, 1]} : vector<8x384xf32> to vector<8x128xf32>
    %26 = vector.extract_strided_slice %16 {offsets = [0, 384], sizes = [8, 128], strides = [1, 1]} : vector<8x512xf32> to vector<8x128xf32>
    %27 = math.tanh %26 : vector<8x128xf32>
    %28 = arith.mulf %24, %9 : vector<8x128xf32>
    %29 = arith.mulf %23, %27 : vector<8x128xf32>
    %30 = arith.addf %28, %29 : vector<8x128xf32>
    %31 = math.tanh %30 : vector<8x128xf32>
    %32 = arith.mulf %25, %31 : vector<8x128xf32>
    %c1_i32 = arith.constant 1 : i32
    %33 = arith.index_cast %c1_i32 : i32 to index
    %c0_16 = arith.constant 0 : index
    %c0_17 = arith.constant 0 : index
    %34 = vector.load %arg7[%33, %c0_16, %c0_17] : memref<8x8x512xf32, #tpu.memory_space<vmem>>, vector<1x8x512xf32>
    %35 = vector.shape_cast %34 : vector<1x8x512xf32> to vector<8x512xf32>
    %36 = arith.truncf %32 : vector<8x128xf32> to vector<8x128xbf16>
    %c0_18 = arith.constant 0 : index
    %c0_19 = arith.constant 0 : index
    %37 = vector.load %arg2[%c0_18, %c0_19] : memref<128x512xbf16, #tpu.memory_space<vmem>>, vector<128x512xbf16>
    %cst_20 = arith.constant dense<0.000000e+00> : vector<8x512xf32>
    %38 = tpu.matmul %36, %37, %cst_20 {dimension_numbers = #tpu.dot_dimension_numbers<[1], [0], [0], [1], [0, 0, 1, 1], [], []>} : vector<8x128xbf16>, vector<128x512xbf16>, vector<8x512xf32> -> vector<8x512xf32>
    %39 = arith.addf %35, %38 : vector<8x512xf32>
    %40 = vector.extract_strided_slice %39 {offsets = [0, 0], sizes = [8, 384], strides = [1, 1]} : vector<8x512xf32> to vector<8x384xf32>
    %41 = arith.negf %40 : vector<8x384xf32>
    %42 = math.exp %41 : vector<8x384xf32>
    %cst_21 = arith.constant 1.000000e+00 : f32
    %43 = vector.broadcast %cst_21 : f32 to vector<8x384xf32>
    %44 = arith.addf %43, %42 : vector<8x384xf32>
    %45 = arith.divf %43, %44 : vector<8x384xf32>
    %46 = vector.extract_strided_slice %45 {offsets = [0, 0], sizes = [8, 128], strides = [1, 1]} : vector<8x384xf32> to vector<8x128xf32>
    %47 = vector.extract_strided_slice %45 {offsets = [0, 128], sizes = [8, 128], strides = [1, 1]} : vector<8x384xf32> to vector<8x128xf32>
    %48 = vector.extract_strided_slice %45 {offsets = [0, 256], sizes = [8, 128], strides = [1, 1]} : vector<8x384xf32> to vector<8x128xf32>
    %49 = vector.extract_strided_slice %39 {offsets = [0, 384], sizes = [8, 128], strides = [1, 1]} : vector<8x512xf32> to vector<8x128xf32>
    %50 = math.tanh %49 : vector<8x128xf32>
    %51 = arith.mulf %47, %30 : vector<8x128xf32>
    %52 = arith.mulf %46, %50 : vector<8x128xf32>
    %53 = arith.addf %51, %52 : vector<8x128xf32>
    %54 = math.tanh %53 : vector<8x128xf32>
    %55 = arith.mulf %48, %54 : vector<8x128xf32>
    %c2_i32 = arith.constant 2 : i32
    %56 = arith.index_cast %c2_i32 : i32 to index
    %c0_22 = arith.constant 0 : index
    %c0_23 = arith.constant 0 : index
    %57 = vector.load %arg7[%56, %c0_22, %c0_23] : memref<8x8x512xf32, #tpu.memory_space<vmem>>, vector<1x8x512xf32>
    %58 = vector.shape_cast %57 : vector<1x8x512xf32> to vector<8x512xf32>
    %59 = arith.truncf %55 : vector<8x128xf32> to vector<8x128xbf16>
    %c0_24 = arith.constant 0 : index
    %c0_25 = arith.constant 0 : index
    %60 = vector.load %arg2[%c0_24, %c0_25] : memref<128x512xbf16, #tpu.memory_space<vmem>>, vector<128x512xbf16>
    %cst_26 = arith.constant dense<0.000000e+00> : vector<8x512xf32>
    %61 = tpu.matmul %59, %60, %cst_26 {dimension_numbers = #tpu.dot_dimension_numbers<[1], [0], [0], [1], [0, 0, 1, 1], [], []>} : vector<8x128xbf16>, vector<128x512xbf16>, vector<8x512xf32> -> vector<8x512xf32>
    %62 = arith.addf %58, %61 : vector<8x512xf32>
    %63 = vector.extract_strided_slice %62 {offsets = [0, 0], sizes = [8, 384], strides = [1, 1]} : vector<8x512xf32> to vector<8x384xf32>
    %64 = arith.negf %63 : vector<8x384xf32>
    %65 = math.exp %64 : vector<8x384xf32>
    %cst_27 = arith.constant 1.000000e+00 : f32
    %66 = vector.broadcast %cst_27 : f32 to vector<8x384xf32>
    %67 = arith.addf %66, %65 : vector<8x384xf32>
    %68 = arith.divf %66, %67 : vector<8x384xf32>
    %69 = vector.extract_strided_slice %68 {offsets = [0, 0], sizes = [8, 128], strides = [1, 1]} : vector<8x384xf32> to vector<8x128xf32>
    %70 = vector.extract_strided_slice %68 {offsets = [0, 128], sizes = [8, 128], strides = [1, 1]} : vector<8x384xf32> to vector<8x128xf32>
    %71 = vector.extract_strided_slice %68 {offsets = [0, 256], sizes = [8, 128], strides = [1, 1]} : vector<8x384xf32> to vector<8x128xf32>
    %72 = vector.extract_strided_slice %62 {offsets = [0, 384], sizes = [8, 128], strides = [1, 1]} : vector<8x512xf32> to vector<8x128xf32>
    %73 = math.tanh %72 : vector<8x128xf32>
    %74 = arith.mulf %70, %53 : vector<8x128xf32>
    %75 = arith.mulf %69, %73 : vector<8x128xf32>
    %76 = arith.addf %74, %75 : vector<8x128xf32>
    %77 = math.tanh %76 : vector<8x128xf32>
    %78 = arith.mulf %71, %77 : vector<8x128xf32>
    %c3_i32 = arith.constant 3 : i32
    %79 = arith.index_cast %c3_i32 : i32 to index
    %c0_28 = arith.constant 0 : index
    %c0_29 = arith.constant 0 : index
    %80 = vector.load %arg7[%79, %c0_28, %c0_29] : memref<8x8x512xf32, #tpu.memory_space<vmem>>, vector<1x8x512xf32>
    %81 = vector.shape_cast %80 : vector<1x8x512xf32> to vector<8x512xf32>
    %82 = arith.truncf %78 : vector<8x128xf32> to vector<8x128xbf16>
    %c0_30 = arith.constant 0 : index
    %c0_31 = arith.constant 0 : index
    %83 = vector.load %arg2[%c0_30, %c0_31] : memref<128x512xbf16, #tpu.memory_space<vmem>>, vector<128x512xbf16>
    %cst_32 = arith.constant dense<0.000000e+00> : vector<8x512xf32>
    %84 = tpu.matmul %82, %83, %cst_32 {dimension_numbers = #tpu.dot_dimension_numbers<[1], [0], [0], [1], [0, 0, 1, 1], [], []>} : vector<8x128xbf16>, vector<128x512xbf16>, vector<8x512xf32> -> vector<8x512xf32>
    %85 = arith.addf %81, %84 : vector<8x512xf32>
    %86 = vector.extract_strided_slice %85 {offsets = [0, 0], sizes = [8, 384], strides = [1, 1]} : vector<8x512xf32> to vector<8x384xf32>
    %87 = arith.negf %86 : vector<8x384xf32>
    %88 = math.exp %87 : vector<8x384xf32>
    %cst_33 = arith.constant 1.000000e+00 : f32
    %89 = vector.broadcast %cst_33 : f32 to vector<8x384xf32>
    %90 = arith.addf %89, %88 : vector<8x384xf32>
    %91 = arith.divf %89, %90 : vector<8x384xf32>
    %92 = vector.extract_strided_slice %91 {offsets = [0, 0], sizes = [8, 128], strides = [1, 1]} : vector<8x384xf32> to vector<8x128xf32>
    %93 = vector.extract_strided_slice %91 {offsets = [0, 128], sizes = [8, 128], strides = [1, 1]} : vector<8x384xf32> to vector<8x128xf32>
    %94 = vector.extract_strided_slice %91 {offsets = [0, 256], sizes = [8, 128], strides = [1, 1]} : vector<8x384xf32> to vector<8x128xf32>
    %95 = vector.extract_strided_slice %85 {offsets = [0, 384], sizes = [8, 128], strides = [1, 1]} : vector<8x512xf32> to vector<8x128xf32>
    %96 = math.tanh %95 : vector<8x128xf32>
    %97 = arith.mulf %93, %76 : vector<8x128xf32>
    %98 = arith.mulf %92, %96 : vector<8x128xf32>
    %99 = arith.addf %97, %98 : vector<8x128xf32>
    %100 = math.tanh %99 : vector<8x128xf32>
    %101 = arith.mulf %94, %100 : vector<8x128xf32>
    %c4_i32 = arith.constant 4 : i32
    %102 = arith.index_cast %c4_i32 : i32 to index
    %c0_34 = arith.constant 0 : index
    %c0_35 = arith.constant 0 : index
    %103 = vector.load %arg7[%102, %c0_34, %c0_35] : memref<8x8x512xf32, #tpu.memory_space<vmem>>, vector<1x8x512xf32>
    %104 = vector.shape_cast %103 : vector<1x8x512xf32> to vector<8x512xf32>
    %105 = arith.truncf %101 : vector<8x128xf32> to vector<8x128xbf16>
    %c0_36 = arith.constant 0 : index
    %c0_37 = arith.constant 0 : index
    %106 = vector.load %arg2[%c0_36, %c0_37] : memref<128x512xbf16, #tpu.memory_space<vmem>>, vector<128x512xbf16>
    %cst_38 = arith.constant dense<0.000000e+00> : vector<8x512xf32>
    %107 = tpu.matmul %105, %106, %cst_38 {dimension_numbers = #tpu.dot_dimension_numbers<[1], [0], [0], [1], [0, 0, 1, 1], [], []>} : vector<8x128xbf16>, vector<128x512xbf16>, vector<8x512xf32> -> vector<8x512xf32>
    %108 = arith.addf %104, %107 : vector<8x512xf32>
    %109 = vector.extract_strided_slice %108 {offsets = [0, 0], sizes = [8, 384], strides = [1, 1]} : vector<8x512xf32> to vector<8x384xf32>
    %110 = arith.negf %109 : vector<8x384xf32>
    %111 = math.exp %110 : vector<8x384xf32>
    %cst_39 = arith.constant 1.000000e+00 : f32
    %112 = vector.broadcast %cst_39 : f32 to vector<8x384xf32>
    %113 = arith.addf %112, %111 : vector<8x384xf32>
    %114 = arith.divf %112, %113 : vector<8x384xf32>
    %115 = vector.extract_strided_slice %114 {offsets = [0, 0], sizes = [8, 128], strides = [1, 1]} : vector<8x384xf32> to vector<8x128xf32>
    %116 = vector.extract_strided_slice %114 {offsets = [0, 128], sizes = [8, 128], strides = [1, 1]} : vector<8x384xf32> to vector<8x128xf32>
    %117 = vector.extract_strided_slice %114 {offsets = [0, 256], sizes = [8, 128], strides = [1, 1]} : vector<8x384xf32> to vector<8x128xf32>
    %118 = vector.extract_strided_slice %108 {offsets = [0, 384], sizes = [8, 128], strides = [1, 1]} : vector<8x512xf32> to vector<8x128xf32>
    %119 = math.tanh %118 : vector<8x128xf32>
    %120 = arith.mulf %116, %99 : vector<8x128xf32>
    %121 = arith.mulf %115, %119 : vector<8x128xf32>
    %122 = arith.addf %120, %121 : vector<8x128xf32>
    %123 = math.tanh %122 : vector<8x128xf32>
    %124 = arith.mulf %117, %123 : vector<8x128xf32>
    %c5_i32 = arith.constant 5 : i32
    %125 = arith.index_cast %c5_i32 : i32 to index
    %c0_40 = arith.constant 0 : index
    %c0_41 = arith.constant 0 : index
    %126 = vector.load %arg7[%125, %c0_40, %c0_41] : memref<8x8x512xf32, #tpu.memory_space<vmem>>, vector<1x8x512xf32>
    %127 = vector.shape_cast %126 : vector<1x8x512xf32> to vector<8x512xf32>
    %128 = arith.truncf %124 : vector<8x128xf32> to vector<8x128xbf16>
    %c0_42 = arith.constant 0 : index
    %c0_43 = arith.constant 0 : index
    %129 = vector.load %arg2[%c0_42, %c0_43] : memref<128x512xbf16, #tpu.memory_space<vmem>>, vector<128x512xbf16>
    %cst_44 = arith.constant dense<0.000000e+00> : vector<8x512xf32>
    %130 = tpu.matmul %128, %129, %cst_44 {dimension_numbers = #tpu.dot_dimension_numbers<[1], [0], [0], [1], [0, 0, 1, 1], [], []>} : vector<8x128xbf16>, vector<128x512xbf16>, vector<8x512xf32> -> vector<8x512xf32>
    %131 = arith.addf %127, %130 : vector<8x512xf32>
    %132 = vector.extract_strided_slice %131 {offsets = [0, 0], sizes = [8, 384], strides = [1, 1]} : vector<8x512xf32> to vector<8x384xf32>
    %133 = arith.negf %132 : vector<8x384xf32>
    %134 = math.exp %133 : vector<8x384xf32>
    %cst_45 = arith.constant 1.000000e+00 : f32
    %135 = vector.broadcast %cst_45 : f32 to vector<8x384xf32>
    %136 = arith.addf %135, %134 : vector<8x384xf32>
    %137 = arith.divf %135, %136 : vector<8x384xf32>
    %138 = vector.extract_strided_slice %137 {offsets = [0, 0], sizes = [8, 128], strides = [1, 1]} : vector<8x384xf32> to vector<8x128xf32>
    %139 = vector.extract_strided_slice %137 {offsets = [0, 128], sizes = [8, 128], strides = [1, 1]} : vector<8x384xf32> to vector<8x128xf32>
    %140 = vector.extract_strided_slice %137 {offsets = [0, 256], sizes = [8, 128], strides = [1, 1]} : vector<8x384xf32> to vector<8x128xf32>
    %141 = vector.extract_strided_slice %131 {offsets = [0, 384], sizes = [8, 128], strides = [1, 1]} : vector<8x512xf32> to vector<8x128xf32>
    %142 = math.tanh %141 : vector<8x128xf32>
    %143 = arith.mulf %139, %122 : vector<8x128xf32>
    %144 = arith.mulf %138, %142 : vector<8x128xf32>
    %145 = arith.addf %143, %144 : vector<8x128xf32>
    %146 = math.tanh %145 : vector<8x128xf32>
    %147 = arith.mulf %140, %146 : vector<8x128xf32>
    %c6_i32 = arith.constant 6 : i32
    %148 = arith.index_cast %c6_i32 : i32 to index
    %c0_46 = arith.constant 0 : index
    %c0_47 = arith.constant 0 : index
    %149 = vector.load %arg7[%148, %c0_46, %c0_47] : memref<8x8x512xf32, #tpu.memory_space<vmem>>, vector<1x8x512xf32>
    %150 = vector.shape_cast %149 : vector<1x8x512xf32> to vector<8x512xf32>
    %151 = arith.truncf %147 : vector<8x128xf32> to vector<8x128xbf16>
    %c0_48 = arith.constant 0 : index
    %c0_49 = arith.constant 0 : index
    %152 = vector.load %arg2[%c0_48, %c0_49] : memref<128x512xbf16, #tpu.memory_space<vmem>>, vector<128x512xbf16>
    %cst_50 = arith.constant dense<0.000000e+00> : vector<8x512xf32>
    %153 = tpu.matmul %151, %152, %cst_50 {dimension_numbers = #tpu.dot_dimension_numbers<[1], [0], [0], [1], [0, 0, 1, 1], [], []>} : vector<8x128xbf16>, vector<128x512xbf16>, vector<8x512xf32> -> vector<8x512xf32>
    %154 = arith.addf %150, %153 : vector<8x512xf32>
    %155 = vector.extract_strided_slice %154 {offsets = [0, 0], sizes = [8, 384], strides = [1, 1]} : vector<8x512xf32> to vector<8x384xf32>
    %156 = arith.negf %155 : vector<8x384xf32>
    %157 = math.exp %156 : vector<8x384xf32>
    %cst_51 = arith.constant 1.000000e+00 : f32
    %158 = vector.broadcast %cst_51 : f32 to vector<8x384xf32>
    %159 = arith.addf %158, %157 : vector<8x384xf32>
    %160 = arith.divf %158, %159 : vector<8x384xf32>
    %161 = vector.extract_strided_slice %160 {offsets = [0, 0], sizes = [8, 128], strides = [1, 1]} : vector<8x384xf32> to vector<8x128xf32>
    %162 = vector.extract_strided_slice %160 {offsets = [0, 128], sizes = [8, 128], strides = [1, 1]} : vector<8x384xf32> to vector<8x128xf32>
    %163 = vector.extract_strided_slice %160 {offsets = [0, 256], sizes = [8, 128], strides = [1, 1]} : vector<8x384xf32> to vector<8x128xf32>
    %164 = vector.extract_strided_slice %154 {offsets = [0, 384], sizes = [8, 128], strides = [1, 1]} : vector<8x512xf32> to vector<8x128xf32>
    %165 = math.tanh %164 : vector<8x128xf32>
    %166 = arith.mulf %162, %145 : vector<8x128xf32>
    %167 = arith.mulf %161, %165 : vector<8x128xf32>
    %168 = arith.addf %166, %167 : vector<8x128xf32>
    %169 = math.tanh %168 : vector<8x128xf32>
    %170 = arith.mulf %163, %169 : vector<8x128xf32>
    %c7_i32 = arith.constant 7 : i32
    %171 = arith.index_cast %c7_i32 : i32 to index
    %c0_52 = arith.constant 0 : index
    %c0_53 = arith.constant 0 : index
    %172 = vector.load %arg7[%171, %c0_52, %c0_53] : memref<8x8x512xf32, #tpu.memory_space<vmem>>, vector<1x8x512xf32>
    %173 = vector.shape_cast %172 : vector<1x8x512xf32> to vector<8x512xf32>
    %174 = arith.truncf %170 : vector<8x128xf32> to vector<8x128xbf16>
    %c0_54 = arith.constant 0 : index
    %c0_55 = arith.constant 0 : index
    %175 = vector.load %arg2[%c0_54, %c0_55] : memref<128x512xbf16, #tpu.memory_space<vmem>>, vector<128x512xbf16>
    %cst_56 = arith.constant dense<0.000000e+00> : vector<8x512xf32>
    %176 = tpu.matmul %174, %175, %cst_56 {dimension_numbers = #tpu.dot_dimension_numbers<[1], [0], [0], [1], [0, 0, 1, 1], [], []>} : vector<8x128xbf16>, vector<128x512xbf16>, vector<8x512xf32> -> vector<8x512xf32>
    %177 = arith.addf %173, %176 : vector<8x512xf32>
    %178 = vector.extract_strided_slice %177 {offsets = [0, 0], sizes = [8, 384], strides = [1, 1]} : vector<8x512xf32> to vector<8x384xf32>
    %179 = arith.negf %178 : vector<8x384xf32>
    %180 = math.exp %179 : vector<8x384xf32>
    %cst_57 = arith.constant 1.000000e+00 : f32
    %181 = vector.broadcast %cst_57 : f32 to vector<8x384xf32>
    %182 = arith.addf %181, %180 : vector<8x384xf32>
    %183 = arith.divf %181, %182 : vector<8x384xf32>
    %184 = vector.extract_strided_slice %183 {offsets = [0, 0], sizes = [8, 128], strides = [1, 1]} : vector<8x384xf32> to vector<8x128xf32>
    %185 = vector.extract_strided_slice %183 {offsets = [0, 128], sizes = [8, 128], strides = [1, 1]} : vector<8x384xf32> to vector<8x128xf32>
    %186 = vector.extract_strided_slice %183 {offsets = [0, 256], sizes = [8, 128], strides = [1, 1]} : vector<8x384xf32> to vector<8x128xf32>
    %187 = vector.extract_strided_slice %177 {offsets = [0, 384], sizes = [8, 128], strides = [1, 1]} : vector<8x512xf32> to vector<8x128xf32>
    %188 = math.tanh %187 : vector<8x128xf32>
    %189 = arith.mulf %185, %168 : vector<8x128xf32>
    %190 = arith.mulf %184, %188 : vector<8x128xf32>
    %191 = arith.addf %189, %190 : vector<8x128xf32>
    %192 = math.tanh %191 : vector<8x128xf32>
    %193 = arith.mulf %186, %192 : vector<8x128xf32>
    %c8_i32 = arith.constant 8 : i32
    %194 = arith.truncf %193 : vector<8x128xf32> to vector<8x128xbf16>
    %c0_58 = arith.constant 0 : index
    %c0_59 = arith.constant 0 : index
    %195 = vector.load %arg4[%c0_58, %c0_59] : memref<128x128xbf16, #tpu.memory_space<vmem>>, vector<128x128xbf16>
    %cst_60 = arith.constant dense<0.000000e+00> : vector<8x128xf32>
    %196 = tpu.matmul %194, %195, %cst_60 {dimension_numbers = #tpu.dot_dimension_numbers<[1], [0], [0], [1], [0, 0, 1, 1], [], []>} : vector<8x128xbf16>, vector<128x128xbf16>, vector<8x128xf32> -> vector<8x128xf32>
    %c0_61 = arith.constant 0 : index
    %c0_62 = arith.constant 0 : index
    %197 = vector.load %arg5[%c0_61, %c0_62] : memref<1x128xf32, #tpu.memory_space<vmem>>, vector<1x128xf32>
    %198 = vector.broadcast %197 : vector<1x128xf32> to vector<8x128xf32>
    %199 = arith.addf %196, %198 : vector<8x128xf32>
    %c0_63 = arith.constant 0 : index
    %c0_64 = arith.constant 0 : index
    %200 = vector.load %arg6[%c0_63, %c0_64] : memref<8x128xf32, #tpu.memory_space<vmem>>, vector<8x128xf32>
    tpu.vector_store %arg6[%c0_63, %c0_64], %199 {strides = array<i32>} : memref<8x128xf32, #tpu.memory_space<vmem>>, vector<8x128xf32>,
    return
  }
}

</mosaic_0001>

<llo_original>
// kernel: tpu_custom_call.1
$region0: #{tpu_custom_call.1}
  #allocation0 [shape = 'u32[]', space=smem, size = 0x4, offset = 0x4, fixed_abs, tag = 'smem constant byte address 0x4 - core index']
  #allocation1 [shape = 'u32[144,128]{1,0:T(1,128)}', space=vmem, size = 0x12000, scoped, tag = 'internal scratch']
  #allocation2 [shape = 'f32[8,8,512]{2,1,0:T(8,128)}', space=vmem, size = 0x20000, scoped, tag = 'scratch operand']
  %s0 = inlined_call_operand.vmem [shape: bf16[64,16], index: 0, kind: input, shape index: {}]
  %s1 = inlined_call_operand.vmem [shape: bf16[16,512], index: 1, kind: input, shape index: {}]
  %s2 = inlined_call_operand.hbm [shape: bf16[128,512], index: 2, kind: input, shape index: {}]
  %s3 = inlined_call_operand.vmem [shape: f32[1,512], index: 3, kind: input, shape index: {}]
  %s4 = inlined_call_operand.hbm [shape: bf16[128,128], index: 4, kind: input, shape index: {}]
  %s5 = inlined_call_operand.vmem [shape: f32[1,128], index: 5, kind: input, shape index: {}]
  %s6 = inlined_call_operand.hbm [shape: f32[8,128], index: 6, kind: output, shape index: {}]
  %s7 = sld [smem:[#allocation0]]
  $region42: #{tpu_custom_call.1} parent=0
    _
  %s9 = ssub.s32 1, %s7
  %s10 = scalar_select 0, %s9, %s7
  $region1: #{tpu_custom_call.1} parent=0
    #allocation3 [shape = 'u8[131072]{0}', space=vmem, size = 0x20000, scoped, tag = 'input window, operand 2, single buffered']
    #allocation4 [shape = 's32[1]{0}', space=sflag, size = 0x4, scoped, tag = 'scoped memory for tpu_custom_call.1']
    #allocation5 [shape = 's32[1]{0}', space=sflag, size = 0x4, scoped, tag = 'scoped memory for tpu_custom_call.1']
    #allocation6 [shape = 'u8[32768]{0}', space=vmem, size = 0x8000, scoped, tag = 'input window, operand 4, single buffered']
    #allocation7 [shape = 's32[1]{0}', space=sflag, size = 0x4, scoped, tag = 'scoped memory for tpu_custom_call.1']
    #allocation8 [shape = 'u8[4096]{0}', space=vmem, size = 0x1000, scoped, tag = 'output window, operand 0, single buffered']
    %11 = vsyncpa [#allocation4], 0
    %12 = vsyncpa [#allocation7], 0
    %13 = vsyncpa [#allocation5], 0
    // Predicated region
    $region2: #{tpu_custom_call.1} parent=1 // pred_check
      _
    $region3: #{tpu_custom_call.1} parent=1 // pred_check_branch
      %15 = sbr.rel (0) target = $region5
    $region4: #{tpu_custom_call.1} parent=1 // pred_region
      _
    $region5: #{tpu_custom_call.1} parent=1 // pred_fallthru
      _
    // Predicated region
    $region6: #{tpu_custom_call.1} parent=1 // pred_check
      _
    $region7: #{tpu_custom_call.1} parent=1 // pred_check_branch
      %17 = sbr.rel (0) target = $region9
    $region8: #{tpu_custom_call.1} parent=1 // pred_region
      _
    $region9: #{tpu_custom_call.1} parent=1 // pred_fallthru
      _
    // Predicated region
    $region10: #{tpu_custom_call.1} parent=1 // pred_check
      _
    $region11: #{tpu_custom_call.1} parent=1 // pred_check_branch
      %19 = sbr.rel (0) target = $region13
    $region12: #{tpu_custom_call.1} parent=1 // pred_region
      %s21 = ssub.s32 4096, 4096
      %22 = vsyncadd [#allocation4], %s21
      %s23 = sshll.u32 [#allocation3], 4
      %s24 = int_to_ptr.vmem [resolvable:$true] %s23
      %29 = dma.hbm_to_vmem [thread:$0]  %s2, 4096, %s24, [#allocation4], 256, 256, 16
    $region13: #{tpu_custom_call.1} parent=1 // pred_fallthru
      _
    // Predicated region
    $region14: #{tpu_custom_call.1} parent=1 // pred_check
      _
    $region15: #{tpu_custom_call.1} parent=1 // pred_check_branch
      %31 = sbr.rel (0) target = $region17
    $region16: #{tpu_custom_call.1} parent=1 // pred_region
      _
    $region17: #{tpu_custom_call.1} parent=1 // pred_fallthru
      _
    // Predicated region
    $region18: #{tpu_custom_call.1} parent=1 // pred_check
      _
    $region19: #{tpu_custom_call.1} parent=1 // pred_check_branch
      %33 = sbr.rel (0) target = $region21
    $region20: #{tpu_custom_call.1} parent=1 // pred_region
      %s35 = ssub.s32 1024, 1024
      %36 = vsyncadd [#allocation7], %s35
      %s37 = sshll.u32 [#allocation6], 4
      %s38 = int_to_ptr.vmem [resolvable:$true] %s37
      %43 = dma.hbm_to_vmem [thread:$0]  %s4, 1024, %s38, [#allocation7], 64, 64, 4
    $region21: #{tpu_custom_call.1} parent=1 // pred_fallthru
      _
    // Predicated region
    $region22: #{tpu_custom_call.1} parent=1 // pred_check
      _
    $region23: #{tpu_custom_call.1} parent=1 // pred_check_branch
      %45 = sbr.rel (0) target = $region25
    $region24: #{tpu_custom_call.1} parent=1 // pred_region
      _
    $region25: #{tpu_custom_call.1} parent=1 // pred_fallthru
      _
    // Predicated region
    $region26: #{tpu_custom_call.1} parent=1 // pred_check
      _
    $region27: #{tpu_custom_call.1} parent=1 // pred_check_branch
      %47 = sbr.rel (0) target = $region29
    $region28: #{tpu_custom_call.1} parent=1 // pred_region
      %48 = dma.done [#allocation4], 4096
    $region29: #{tpu_custom_call.1} parent=1 // pred_fallthru
      _
    // Predicated region
    $region30: #{tpu_custom_call.1} parent=1 // pred_check
      _
    $region31: #{tpu_custom_call.1} parent=1 // pred_check_branch
      %50 = sbr.rel (0) target = $region33
    $region32: #{tpu_custom_call.1} parent=1 // pred_region
      %51 = dma.done [#allocation7], 1024
    $region33: #{tpu_custom_call.1} parent=1 // pred_fallthru
      _
    %v53 = vld [vmem:[%s0] sm:$0xf]
    %v54 = vld [vmem:[%s0 + $0x4] sm:$0xf]
    %v55 = vld [vmem:[%s0 + $0x8] sm:$0xf]
    %v56 = vld [vmem:[%s0 + $0xc] sm:$0xf]
    %v57 = vld [vmem:[%s0 + $0x10] sm:$0xf]
    %v58 = vld [vmem:[%s0 + $0x14] sm:$0xf]
    %v59 = vld [vmem:[%s0 + $0x18] sm:$0xf]
    %v60 = vld [vmem:[%s0 + $0x1c] sm:$0xf]
    %v61 = vld [vmem:[%s1] sm:$0xff]
    %v62 = vld [vmem:[%s1 + $0x8] sm:$0xff]
    %v63 = vld [vmem:[%s1 + $0x10] sm:$0xff]
    %v64 = vld [vmem:[%s1 + $0x18] sm:$0xff]
    %v65 = vld [vmem:[%s3] sm:$0xf]
    %v67 = vlaneseq
    %v68 = vshrl.u32 %v67, 7
    %v69 = vsub.s32 0, %v68
    %v70 = vrot.slane %v65, %v69
    %v71 = vlaneseq
    %v72 = vshrl.u32 %v71, 7
    %v73 = vsub.s32 1, %v72
    %v74 = vrot.slane %v65, %v73
    %v75 = vlaneseq
    %v76 = vshrl.u32 %v75, 7
    %v77 = vsub.s32 2, %v76
    %v78 = vrot.slane %v65, %v77
    %v79 = vlaneseq
    %v80 = vshrl.u32 %v79, 7
    %v81 = vsub.s32 3, %v80
    %v82 = vrot.slane %v65, %v81
    %v95 = vunpack.c.l.b16 %v53
    %v96 = vunpack.c.l.b16 %v54
    %v97 = vunpack.c.l.b16 %v55
    %v98 = vunpack.c.l.b16 %v56
    %v99 = vunpack.c.l.b16 %v57
    %v100 = vunpack.c.l.b16 %v58
    %v101 = vunpack.c.l.b16 %v59
    %v102 = vunpack.c.l.b16 %v60
    %v103 = vpack.c.b16 %v96, %v95
    %v104 = vpack.c.b16 %v98, %v97
    %v105 = vpack.c.b16 %v100, %v99
    %v106 = vpack.c.b16 %v102, %v101
    %v111 = vunpack.c.l.b16 %v61
    %v112 = vunpack.c.h.b16 %v61
    %v113 = vunpack.c.l.b16 %v62
    %v114 = vunpack.c.h.b16 %v62
    %v115 = vunpack.c.l.b16 %v63
    %v116 = vunpack.c.h.b16 %v63
    %v117 = vunpack.c.l.b16 %v64
    %v118 = vunpack.c.h.b16 %v64
    %v119 = vpack.c.b16 %v115, %v111
    %v120 = vpack.c.b16 %v116, %v112
    %v121 = vpack.c.b16 %v117, %v113
    %v122 = vpack.c.b16 %v118, %v114
    %vm127 = vcmask 130048
    %v129 = vsel %vm127, %v103, 0
    %v132 = vsel %vm127, %v104, 0
    %v135 = vsel %vm127, %v105, 0
    %v138 = vsel %vm127, %v106, 0
    %140 = vmatprep.subr.bf16.mxu0 %v120
    %141 = vmatpush1.bf16.msra.mxu0 %v119
    %142 = vmatprep.subr.bf16.mxu0 0
    %143 = vmatpush1.bf16.msra.mxu0 0
    %144 = vmatprep.subr.bf16.mxu0 0
    %145 = vmatpush1.bf16.msra.mxu0 0
    %146 = vmatprep.subr.bf16.mxu0 0
    %147 = vmatpush1.bf16.msra.mxu0 0
    %148 = vmatprep.subr.bf16.mxu0 0
    %149 = vmatpush1.bf16.msra.mxu0 0
    %150 = vmatprep.subr.bf16.mxu0 0
    %151 = vmatpush1.bf16.msra.mxu0 0
    %152 = vmatprep.subr.bf16.mxu0 0
    %153 = vmatpush1.bf16.msra.mxu0 0
    %154 = vmatprep.subr.bf16.mxu0 0
    %155 = vmatpush1.bf16.msra.mxu0 0
    %156 = vmatprep.subr.bf16.mxu0 0
    %157 = vmatpush1.bf16.msra.mxu0 0
    %158 = vmatprep.subr.bf16.mxu0 0
    %159 = vmatpush1.bf16.msra.mxu0 0
    %160 = vmatprep.subr.bf16.mxu0 0
    %161 = vmatpush1.bf16.msra.mxu0 0
    %162 = vmatprep.subr.bf16.mxu0 0
    %163 = vmatpush1.bf16.msra.mxu0 0
    %164 = vmatprep.subr.bf16.mxu0 0
    %165 = vmatpush1.bf16.msra.mxu0 0
    %166 = vmatprep.subr.bf16.mxu0 0
    %167 = vmatpush1.bf16.msra.mxu0 0
    %168 = vmatprep.subr.bf16.mxu0 0
    %169 = vmatpush1.bf16.msra.mxu0 0
    %170 = vmatprep.subr.bf16.mxu0 0
    %171 = vmatpush1.bf16.msra.mxu0 0
    %172 = vmatprep.mubr.bf16.mxu0 0
    %173 = vmatmul.mubr.bf16.gmra.mrb[0].mxu0 %v129
    %v174 = vpop.f32.mrb[0].mxu0
    %v175 = vadd.f32 %v70, %v174
    %v176 = vpop.f32.mrb[0].mxu0
    %v177 = vadd.f32 %v74, %v176
    %v178 = vpop.f32.mrb[0].mxu0
    %v179 = vadd.f32 %v70, %v178
    %v180 = vpop.f32.mrb[0].mxu0
    %v181 = vadd.f32 %v74, %v180
    %182 = vmatprep.mubr.bf16.mxu0 0
    %183 = vmatmul.mubr.bf16.gmra.mrb[0].mxu0 %v132
    %v184 = vpop.f32.mrb[0].mxu0
    %v185 = vadd.f32 %v70, %v184
    %v186 = vpop.f32.mrb[0].mxu0
    %v187 = vadd.f32 %v74, %v186
    %v188 = vpop.f32.mrb[0].mxu0
    %v189 = vadd.f32 %v70, %v188
    %v190 = vpop.f32.mrb[0].mxu0
    %v191 = vadd.f32 %v74, %v190
    %192 = vmatprep.mubr.bf16.mxu0 0
    %193 = vmatmul.mubr.bf16.gmra.mrb[0].mxu0 %v135
    %v194 = vpop.f32.mrb[0].mxu0
    %v195 = vadd.f32 %v70, %v194
    %v196 = vpop.f32.mrb[0].mxu0
    %v197 = vadd.f32 %v74, %v196
    %v198 = vpop.f32.mrb[0].mxu0
    %v199 = vadd.f32 %v70, %v198
    %v200 = vpop.f32.mrb[0].mxu0
    %v201 = vadd.f32 %v74, %v200
    %202 = vmatprep.mubr.bf16.mxu0 0
    %203 = vmatmul.mubr.bf16.gmra.mrb[0].mxu0 %v138
    %v204 = vpop.f32.mrb[0].mxu0
    %v205 = vadd.f32 %v70, %v204
    %v206 = vpop.f32.mrb[0].mxu0
    %v207 = vadd.f32 %v74, %v206
    %v208 = vpop.f32.mrb[0].mxu0
    %v209 = vadd.f32 %v70, %v208
    %v210 = vpop.f32.mrb[0].mxu0
    %v211 = vadd.f32 %v74, %v210
    %212 = vdwg.mxu0
    %213 = vmatprep.subr.bf16.mxu0 %v122
    %214 = vmatpush1.bf16.msra.mxu0 %v121
    %215 = vmatprep.subr.bf16.mxu0 0
    %216 = vmatpush1.bf16.msra.mxu0 0
    %217 = vmatprep.subr.bf16.mxu0 0
    %218 = vmatpush1.bf16.msra.mxu0 0
    %219 = vmatprep.subr.bf16.mxu0 0
    %220 = vmatpush1.bf16.msra.mxu0 0
    %221 = vmatprep.subr.bf16.mxu0 0
    %222 = vmatpush1.bf16.msra.mxu0 0
    %223 = vmatprep.subr.bf16.mxu0 0
    %224 = vmatpush1.bf16.msra.mxu0 0
    %225 = vmatprep.subr.bf16.mxu0 0
    %226 = vmatpush1.bf16.msra.mxu0 0
    %227 = vmatprep.subr.bf16.mxu0 0
    %228 = vmatpush1.bf16.msra.mxu0 0
    %229 = vmatprep.subr.bf16.mxu0 0
    %230 = vmatpush1.bf16.msra.mxu0 0
    %231 = vmatprep.subr.bf16.mxu0 0
    %232 = vmatpush1.bf16.msra.mxu0 0
    %233 = vmatprep.subr.bf16.mxu0 0
    %234 = vmatpush1.bf16.msra.mxu0 0
    %235 = vmatprep.subr.bf16.mxu0 0
    %236 = vmatpush1.bf16.msra.mxu0 0
    %237 = vmatprep.subr.bf16.mxu0 0
    %238 = vmatpush1.bf16.msra.mxu0 0
    %239 = vmatprep.subr.bf16.mxu0 0
    %240 = vmatpush1.bf16.msra.mxu0 0
    %241 = vmatprep.subr.bf16.mxu0 0
    %242 = vmatpush1.bf16.msra.mxu0 0
    %243 = vmatprep.subr.bf16.mxu0 0
    %244 = vmatpush1.bf16.msra.mxu0 0
    %245 = vmatprep.mubr.bf16.mxu0 0
    %246 = vmatmul.mubr.bf16.gmra.mrb[0].mxu0 %v129
    %v247 = vpop.f32.mrb[0].mxu0
    %v248 = vadd.f32 %v78, %v247
    %v249 = vpop.f32.mrb[0].mxu0
    %v250 = vadd.f32 %v82, %v249
    %v251 = vpop.f32.mrb[0].mxu0
    %v252 = vadd.f32 %v78, %v251
    %v253 = vpop.f32.mrb[0].mxu0
    %v254 = vadd.f32 %v82, %v253
    %255 = vmatprep.mubr.bf16.mxu0 0
    %256 = vmatmul.mubr.bf16.gmra.mrb[0].mxu0 %v132
    %v257 = vpop.f32.mrb[0].mxu0
    %v258 = vadd.f32 %v78, %v257
    %v259 = vpop.f32.mrb[0].mxu0
    %v260 = vadd.f32 %v82, %v259
    %v261 = vpop.f32.mrb[0].mxu0
    %v262 = vadd.f32 %v78, %v261
    %v263 = vpop.f32.mrb[0].mxu0
    %v264 = vadd.f32 %v82, %v263
    %265 = vmatprep.mubr.bf16.mxu0 0
    %266 = vmatmul.mubr.bf16.gmra.mrb[0].mxu0 %v135
    %v267 = vpop.f32.mrb[0].mxu0
    %v268 = vadd.f32 %v78, %v267
    %v269 = vpop.f32.mrb[0].mxu0
    %v270 = vadd.f32 %v82, %v269
    %v271 = vpop.f32.mrb[0].mxu0
    %v272 = vadd.f32 %v78, %v271
    %v273 = vpop.f32.mrb[0].mxu0
    %v274 = vadd.f32 %v82, %v273
    %275 = vmatprep.mubr.bf16.mxu0 0
    %276 = vmatmul.mubr.bf16.gmra.mrb[0].mxu0 %v138
    %v277 = vpop.f32.mrb[0].mxu0
    %v278 = vadd.f32 %v78, %v277
    %v279 = vpop.f32.mrb[0].mxu0
    %v280 = vadd.f32 %v82, %v279
    %v281 = vpop.f32.mrb[0].mxu0
    %v282 = vadd.f32 %v78, %v281
    %v283 = vpop.f32.mrb[0].mxu0
    %v284 = vadd.f32 %v82, %v283
    %285 = vdwg.mxu0
    %286 = vst [vmem:[#allocation2] sm:$0xff] %v175
    %287 = vst [vmem:[#allocation2 + $0x8] sm:$0xff] %v177
    %288 = vst [vmem:[#allocation2 + $0x10] sm:$0xff] %v248
    %289 = vst [vmem:[#allocation2 + $0x18] sm:$0xff] %v250
    %290 = vst [vmem:[#allocation2 + $0x20] sm:$0xff] %v179
    %291 = vst [vmem:[#allocation2 + $0x28] sm:$0xff] %v181
    %292 = vst [vmem:[#allocation2 + $0x30] sm:$0xff] %v252
    %293 = vst [vmem:[#allocation2 + $0x38] sm:$0xff] %v254
    %294 = vst [vmem:[#allocation2 + $0x40] sm:$0xff] %v185
    %295 = vst [vmem:[#allocation2 + $0x48] sm:$0xff] %v187
    %296 = vst [vmem:[#allocation2 + $0x50] sm:$0xff] %v258
    %297 = vst [vmem:[#allocation2 + $0x58] sm:$0xff] %v260
    %298 = vst [vmem:[#allocation2 + $0x60] sm:$0xff] %v189
    %299 = vst [vmem:[#allocation2 + $0x68] sm:$0xff] %v191
    %300 = vst [vmem:[#allocation2 + $0x70] sm:$0xff] %v262
    %301 = vst [vmem:[#allocation2 + $0x78] sm:$0xff] %v264
    %302 = vst [vmem:[#allocation2 + $0x80] sm:$0xff] %v195
    %303 = vst [vmem:[#allocation2 + $0x88] sm:$0xff] %v197
    %304 = vst [vmem:[#allocation2 + $0x90] sm:$0xff] %v268
    %305 = vst [vmem:[#allocation2 + $0x98] sm:$0xff] %v270
    %306 = vst [vmem:[#allocation2 + $0xa0] sm:$0xff] %v199
    %307 = vst [vmem:[#allocation2 + $0xa8] sm:$0xff] %v201
    %308 = vst [vmem:[#allocation2 + $0xb0] sm:$0xff] %v272
    %309 = vst [vmem:[#allocation2 + $0xb8] sm:$0xff] %v274
    %310 = vst [vmem:[#allocation2 + $0xc0] sm:$0xff] %v205
    %311 = vst [vmem:[#allocation2 + $0xc8] sm:$0xff] %v207
    %312 = vst [vmem:[#allocation2 + $0xd0] sm:$0xff] %v278
    %313 = vst [vmem:[#allocation2 + $0xd8] sm:$0xff] %v280
    %314 = vst [vmem:[#allocation2 + $0xe0] sm:$0xff] %v209
    %315 = vst [vmem:[#allocation2 + $0xe8] sm:$0xff] %v211
    %316 = vst [vmem:[#allocation2 + $0xf0] sm:$0xff] %v282
    %317 = vst [vmem:[#allocation2 + $0xf8] sm:$0xff] %v284
    %v318 = vld [vmem:[#allocation2] sm:$0xff]
    %v319 = vld [vmem:[#allocation2 + $0x8] sm:$0xff]
    %v320 = vld [vmem:[#allocation2 + $0x10] sm:$0xff]
    %v321 = vld [vmem:[#allocation2 + $0x18] sm:$0xff]
    %v322 = vld [vmem:[#allocation3] sm:$0xff]
    %v323 = vld [vmem:[#allocation3 + $0x8] sm:$0xff]
    %v324 = vld [vmem:[#allocation3 + $0x10] sm:$0xff]
    %v325 = vld [vmem:[#allocation3 + $0x18] sm:$0xff]
    %v326 = vld [vmem:[#allocation3 + $0x20] sm:$0xff]
    %v327 = vld [vmem:[#allocation3 + $0x28] sm:$0xff]
    %v328 = vld [vmem:[#allocation3 + $0x30] sm:$0xff]
    %v329 = vld [vmem:[#allocation3 + $0x38] sm:$0xff]
    %v330 = vld [vmem:[#allocation3 + $0x40] sm:$0xff]
    %v331 = vld [vmem:[#allocation3 + $0x48] sm:$0xff]
    %v332 = vld [vmem:[#allocation3 + $0x50] sm:$0xff]
    %v333 = vld [vmem:[#allocation3 + $0x58] sm:$0xff]
    %v334 = vld [vmem:[#allocation3 + $0x60] sm:$0xff]
    %v335 = vld [vmem:[#allocation3 + $0x68] sm:$0xff]
    %v336 = vld [vmem:[#allocation3 + $0x70] sm:$0xff]
    %v337 = vld [vmem:[#allocation3 + $0x78] sm:$0xff]
    %v338 = vld [vmem:[#allocation3 + $0x80] sm:$0xff]
    %v339 = vld [vmem:[#allocation3 + $0x88] sm:$0xff]
    %v340 = vld [vmem:[#allocation3 + $0x90] sm:$0xff]
    %v341 = vld [vmem:[#allocation3 + $0x98] sm:$0xff]
    %v342 = vld [vmem:[#allocation3 + $0xa0] sm:$0xff]
    %v343 = vld [vmem:[#allocation3 + $0xa8] sm:$0xff]
    %v344 = vld [vmem:[#allocation3 + $0xb0] sm:$0xff]
    %v345 = vld [vmem:[#allocation3 + $0xb8] sm:$0xff]
    %v346 = vld [vmem:[#allocation3 + $0xc0] sm:$0xff]
    %v347 = vld [vmem:[#allocation3 + $0xc8] sm:$0xff]
    %v348 = vld [vmem:[#allocation3 + $0xd0] sm:$0xff]
    %v349 = vld [vmem:[#allocation3 + $0xd8] sm:$0xff]
    %v350 = vld [vmem:[#allocation3 + $0xe0] sm:$0xff]
    %v351 = vld [vmem:[#allocation3 + $0xe8] sm:$0xff]
    %v352 = vld [vmem:[#allocation3 + $0xf0] sm:$0xff]
    %v353 = vld [vmem:[#allocation3 + $0xf8] sm:$0xff]
    %v386 = vunpack.c.l.b16 %v322
    %v387 = vunpack.c.h.b16 %v322
    %v388 = vunpack.c.l.b16 %v323
    %v389 = vunpack.c.h.b16 %v323
    %v390 = vunpack.c.l.b16 %v324
    %v391 = vunpack.c.h.b16 %v324
    %v392 = vunpack.c.l.b16 %v325
    %v393 = vunpack.c.h.b16 %v325
    %v394 = vunpack.c.l.b16 %v326
    %v395 = vunpack.c.h.b16 %v326
    %v396 = vunpack.c.l.b16 %v327
    %v397 = vunpack.c.h.b16 %v327
    %v398 = vunpack.c.l.b16 %v328
    %v399 = vunpack.c.h.b16 %v328
    %v400 = vunpack.c.l.b16 %v329
    %v401 = vunpack.c.h.b16 %v329
    %v402 = vunpack.c.l.b16 %v330
    %v403 = vunpack.c.h.b16 %v330
    %v404 = vunpack.c.l.b16 %v331
    %v405 = vunpack.c.h.b16 %v331
    %v406 = vunpack.c.l.b16 %v332
    %v407 = vunpack.c.h.b16 %v332
    %v408 = vunpack.c.l.b16 %v333
    %v409 = vunpack.c.h.b16 %v333
    %v410 = vunpack.c.l.b16 %v334
    %v411 = vunpack.c.h.b16 %v334
    %v412 = vunpack.c.l.b16 %v335
    %v413 = vunpack.c.h.b16 %v335
    %v414 = vunpack.c.l.b16 %v336
    %v415 = vunpack.c.h.b16 %v336
    %v416 = vunpack.c.l.b16 %v337
    %v417 = vunpack.c.h.b16 %v337
    %v418 = vunpack.c.l.b16 %v338
    %v419 = vunpack.c.h.b16 %v338
    %v420 = vunpack.c.l.b16 %v339
    %v421 = vunpack.c.h.b16 %v339
    %v422 = vunpack.c.l.b16 %v340
    %v423 = vunpack.c.h.b16 %v340
    %v424 = vunpack.c.l.b16 %v341
    %v425 = vunpack.c.h.b16 %v341
    %v426 = vunpack.c.l.b16 %v342
    %v427 = vunpack.c.h.b16 %v342
    %v428 = vunpack.c.l.b16 %v343
    %v429 = vunpack.c.h.b16 %v343
    %v430 = vunpack.c.l.b16 %v344
    %v431 = vunpack.c.h.b16 %v344
    %v432 = vunpack.c.l.b16 %v345
    %v433 = vunpack.c.h.b16 %v345
    %v434 = vunpack.c.l.b16 %v346
    %v435 = vunpack.c.h.b16 %v346
    %v436 = vunpack.c.l.b16 %v347
    %v437 = vunpack.c.h.b16 %v347
    %v438 = vunpack.c.l.b16 %v348
    %v439 = vunpack.c.h.b16 %v348
    %v440 = vunpack.c.l.b16 %v349
    %v441 = vunpack.c.h.b16 %v349
    %v442 = vunpack.c.l.b16 %v350
    %v443 = vunpack.c.h.b16 %v350
    %v444 = vunpack.c.l.b16 %v351
    %v445 = vunpack.c.h.b16 %v351
    %v446 = vunpack.c.l.b16 %v352
    %v447 = vunpack.c.h.b16 %v352
    %v448 = vunpack.c.l.b16 %v353
    %v449 = vunpack.c.h.b16 %v353
    %v450 = vpack.c.b16 %v390, %v386
    %v451 = vpack.c.b16 %v391, %v387
    %v452 = vpack.c.b16 %v392, %v388
    %v453 = vpack.c.b16 %v393, %v389
    %v454 = vpack.c.b16 %v398, %v394
    %v455 = vpack.c.b16 %v399, %v395
    %v456 = vpack.c.b16 %v400, %v396
    %v457 = vpack.c.b16 %v401, %v397
    %v458 = vpack.c.b16 %v406, %v402
    %v459 = vpack.c.b16 %v407, %v403
    %v460 = vpack.c.b16 %v408, %v404
    %v461 = vpack.c.b16 %v409, %v405
    %v462 = vpack.c.b16 %v414, %v410
    %v463 = vpack.c.b16 %v415, %v411
    %v464 = vpack.c.b16 %v416, %v412
    %v465 = vpack.c.b16 %v417, %v413
    %v466 = vpack.c.b16 %v422, %v418
    %v467 = vpack.c.b16 %v423, %v419
    %v468 = vpack.c.b16 %v424, %v420
    %v469 = vpack.c.b16 %v425, %v421
    %v470 = vpack.c.b16 %v430, %v426
    %v471 = vpack.c.b16 %v431, %v427
    %v472 = vpack.c.b16 %v432, %v428
    %v473 = vpack.c.b16 %v433, %v429
    %v474 = vpack.c.b16 %v438, %v434
    %v475 = vpack.c.b16 %v439, %v435
    %v476 = vpack.c.b16 %v440, %v436
    %v477 = vpack.c.b16 %v441, %v437
    %v478 = vpack.c.b16 %v446, %v442
    %v479 = vpack.c.b16 %v447, %v443
    %v480 = vpack.c.b16 %v448, %v444
    %v481 = vpack.c.b16 %v449, %v445
    %514 = vmatprep.subr.bf16.mxu0 %v451
    %515 = vmatpush1.bf16.msra.mxu0 %v450
    %516 = vmatprep.subr.bf16.mxu0 %v455
    %517 = vmatpush1.bf16.msra.mxu0 %v454
    %518 = vmatprep.subr.bf16.mxu0 %v459
    %519 = vmatpush1.bf16.msra.mxu0 %v458
    %520 = vmatprep.subr.bf16.mxu0 %v463
    %521 = vmatpush1.bf16.msra.mxu0 %v462
    %522 = vmatprep.subr.bf16.mxu0 %v467
    %523 = vmatpush1.bf16.msra.mxu0 %v466
    %524 = vmatprep.subr.bf16.mxu0 %v471
    %525 = vmatpush1.bf16.msra.mxu0 %v470
    %526 = vmatprep.subr.bf16.mxu0 %v475
    %527 = vmatpush1.bf16.msra.mxu0 %v474
    %528 = vmatprep.subr.bf16.mxu0 %v479
    %529 = vmatpush1.bf16.msra.mxu0 %v478
    %530 = vmatprep.subr.bf16.mxu0 0
    %531 = vmatpush1.bf16.msra.mxu0 0
    %532 = vmatprep.subr.bf16.mxu0 0
    %533 = vmatpush1.bf16.msra.mxu0 0
    %534 = vmatprep.subr.bf16.mxu0 0
    %535 = vmatpush1.bf16.msra.mxu0 0
    %536 = vmatprep.subr.bf16.mxu0 0
    %537 = vmatpush1.bf16.msra.mxu0 0
    %538 = vmatprep.subr.bf16.mxu0 0
    %539 = vmatpush1.bf16.msra.mxu0 0
    %540 = vmatprep.subr.bf16.mxu0 0
    %541 = vmatpush1.bf16.msra.mxu0 0
    %542 = vmatprep.subr.bf16.mxu0 0
    %543 = vmatpush1.bf16.msra.mxu0 0
    %544 = vmatprep.subr.bf16.mxu0 0
    %545 = vmatpush1.bf16.msra.mxu0 0
    %546 = vmatprep.mubr.bf16.mxu0 0
    %547 = vmatmul.mubr.bf16.gmra.mrb[0].mxu0 0
    %v548 = vpop.f32.mrb[0].mxu0
    %v549 = vadd.f32 0.0, %v548
    %v550 = vpop.f32.mrb[0].mxu0
    %v551 = vadd.f32 0.0, %v550
    %v552 = vpop.f32.mrb[0].mxu0
    %v553 = vpop.f32.mrb[0].mxu0
    %554 = vdwg.mxu0
    %555 = vmatprep.subr.bf16.mxu0 %v453
    %556 = vmatpush1.bf16.msra.mxu0 %v452
    %557 = vmatprep.subr.bf16.mxu0 %v457
    %558 = vmatpush1.bf16.msra.mxu0 %v456
    %559 = vmatprep.subr.bf16.mxu0 %v461
    %560 = vmatpush1.bf16.msra.mxu0 %v460
    %561 = vmatprep.subr.bf16.mxu0 %v465
    %562 = vmatpush1.bf16.msra.mxu0 %v464
    %563 = vmatprep.subr.bf16.mxu0 %v469
    %564 = vmatpush1.bf16.msra.mxu0 %v468
    %565 = vmatprep.subr.bf16.mxu0 %v473
    %566 = vmatpush1.bf16.msra.mxu0 %v472
    %567 = vmatprep.subr.bf16.mxu0 %v477
    %568 = vmatpush1.bf16.msra.mxu0 %v476
    %569 = vmatprep.subr.bf16.mxu0 %v481
    %570 = vmatpush1.bf16.msra.mxu0 %v480
    %571 = vmatprep.subr.bf16.mxu0 0
    %572 = vmatpush1.bf16.msra.mxu0 0
    %573 = vmatprep.subr.bf16.mxu0 0
    %574 = vmatpush1.bf16.msra.mxu0 0
    %575 = vmatprep.subr.bf16.mxu0 0
    %576 = vmatpush1.bf16.msra.mxu0 0
    %577 = vmatprep.subr.bf16.mxu0 0
    %578 = vmatpush1.bf16.msra.mxu0 0
    %579 = vmatprep.subr.bf16.mxu0 0
    %580 = vmatpush1.bf16.msra.mxu0 0
    %581 = vmatprep.subr.bf16.mxu0 0
    %582 = vmatpush1.bf16.msra.mxu0 0
    %583 = vmatprep.subr.bf16.mxu0 0
    %584 = vmatpush1.bf16.msra.mxu0 0
    %585 = vmatprep.subr.bf16.mxu0 0
    %586 = vmatpush1.bf16.msra.mxu0 0
    %587 = vmatprep.mubr.bf16.mxu0 0
    %588 = vmatmul.mubr.bf16.gmra.mrb[0].mxu0 0
    %v589 = vpop.f32.mrb[0].mxu0
    %v590 = vadd.f32 0.0, %v589
    %v591 = vpop.f32.mrb[0].mxu0
    %v592 = vadd.f32 0.0, %v591
    %v593 = vpop.f32.mrb[0].mxu0
    %v594 = vpop.f32.mrb[0].mxu0
    %595 = vdwg.mxu0
    %v596 = vadd.f32 %v318, %v549
    %v597 = vadd.f32 %v319, %v551
    %v598 = vadd.f32 %v320, %v590
    %v599 = vadd.f32 %v321, %v592
    %v600 = vxor.u32 %v596, 2147483648
    %v601 = vxor.u32 %v597, 2147483648
    %v602 = vxor.u32 %v598, 2147483648
    %v603 = vmul.f32 %v600, 1.442695
    %v604 = vpow.pop %v603
    %v605 = vmul.f32 %v601, 1.442695
    %v606 = vpow.pop %v605
    %v607 = vmul.f32 %v602, 1.442695
    %v608 = vpow.pop %v607
    %v609 = vadd.f32 %v604, 1.0
    %v610 = vadd.f32 %v606, 1.0
    %v611 = vadd.f32 %v608, 1.0
    %v612 = vrcp.pop %v609
    %v613 = vmul.f32 1.0, %v612
    %v614 = vrcp.pop %v610
    %v615 = vmul.f32 1.0, %v614
    %v616 = vrcp.pop %v611
    %v617 = vmul.f32 1.0, %v616
    %v618 = vtanh.pop %v599
    %v619 = vmul.f32 %v615, 0.0
    %v620 = vmul.f32 %v613, %v618
    %v621 = vadd.f32 %v619, %v620
    %v622 = vtanh.pop %v621
    %v623 = vmul.f32 %v617, %v622
    %s624 = scalar_lea.vmem [#allocation2], 32
    %v625 = vld [vmem:[%s624] sm:$0xff]
    %v626 = vld [vmem:[%s624 + $0x8] sm:$0xff]
    %v627 = vld [vmem:[%s624 + $0x10] sm:$0xff]
    %v628 = vld [vmem:[%s624 + $0x18] sm:$0xff]
    %v629 = vpack.c.bf16 %v623, %v623
    %630 = vmatprep.subr.bf16.mxu0 %v451
    %631 = vmatpush1.bf16.msra.mxu0 %v450
    %632 = vmatprep.subr.bf16.mxu0 %v455
    %633 = vmatpush1.bf16.msra.mxu0 %v454
    %634 = vmatprep.subr.bf16.mxu0 %v459
    %635 = vmatpush1.bf16.msra.mxu0 %v458
    %636 = vmatprep.subr.bf16.mxu0 %v463
    %637 = vmatpush1.bf16.msra.mxu0 %v462
    %638 = vmatprep.subr.bf16.mxu0 %v467
    %639 = vmatpush1.bf16.msra.mxu0 %v466
    %640 = vmatprep.subr.bf16.mxu0 %v471
    %641 = vmatpush1.bf16.msra.mxu0 %v470
    %642 = vmatprep.subr.bf16.mxu0 %v475
    %643 = vmatpush1.bf16.msra.mxu0 %v474
    %644 = vmatprep.subr.bf16.mxu0 %v479
    %645 = vmatpush1.bf16.msra.mxu0 %v478
    %646 = vmatprep.subr.bf16.mxu0 0
    %647 = vmatpush1.bf16.msra.mxu0 0
    %648 = vmatprep.subr.bf16.mxu0 0
    %649 = vmatpush1.bf16.msra.mxu0 0
    %650 = vmatprep.subr.bf16.mxu0 0
    %651 = vmatpush1.bf16.msra.mxu0 0
    %652 = vmatprep.subr.bf16.mxu0 0
    %653 = vmatpush1.bf16.msra.mxu0 0
    %654 = vmatprep.subr.bf16.mxu0 0
    %655 = vmatpush1.bf16.msra.mxu0 0
    %656 = vmatprep.subr.bf16.mxu0 0
    %657 = vmatpush1.bf16.msra.mxu0 0
    %658 = vmatprep.subr.bf16.mxu0 0
    %659 = vmatpush1.bf16.msra.mxu0 0
    %660 = vmatprep.subr.bf16.mxu0 0
    %661 = vmatpush1.bf16.msra.mxu0 0
    %662 = vmatprep.mubr.bf16.mxu0 0
    %663 = vmatmul.mubr.bf16.gmra.mrb[0].mxu0 %v629
    %v664 = vpop.f32.mrb[0].mxu0
    %v665 = vadd.f32 0.0, %v664
    %v666 = vpop.f32.mrb[0].mxu0
    %v667 = vadd.f32 0.0, %v666
    %v668 = vpop.f32.mrb[0].mxu0
    %v669 = vpop.f32.mrb[0].mxu0
    %670 = vdwg.mxu0
    %671 = vmatprep.subr.bf16.mxu0 %v453
    %672 = vmatpush1.bf16.msra.mxu0 %v452
    %673 = vmatprep.subr.bf16.mxu0 %v457
    %674 = vmatpush1.bf16.msra.mxu0 %v456
    %675 = vmatprep.subr.bf16.mxu0 %v461
    %676 = vmatpush1.bf16.msra.mxu0 %v460
    %677 = vmatprep.subr.bf16.mxu0 %v465
    %678 = vmatpush1.bf16.msra.mxu0 %v464
    %679 = vmatprep.subr.bf16.mxu0 %v469
    %680 = vmatpush1.bf16.msra.mxu0 %v468
    %681 = vmatprep.subr.bf16.mxu0 %v473
    %682 = vmatpush1.bf16.msra.mxu0 %v472
    %683 = vmatprep.subr.bf16.mxu0 %v477
    %684 = vmatpush1.bf16.msra.mxu0 %v476
    %685 = vmatprep.subr.bf16.mxu0 %v481
    %686 = vmatpush1.bf16.msra.mxu0 %v480
    %687 = vmatprep.subr.bf16.mxu0 0
    %688 = vmatpush1.bf16.msra.mxu0 0
    %689 = vmatprep.subr.bf16.mxu0 0
    %690 = vmatpush1.bf16.msra.mxu0 0
    %691 = vmatprep.subr.bf16.mxu0 0
    %692 = vmatpush1.bf16.msra.mxu0 0
    %693 = vmatprep.subr.bf16.mxu0 0
    %694 = vmatpush1.bf16.msra.mxu0 0
    %695 = vmatprep.subr.bf16.mxu0 0
    %696 = vmatpush1.bf16.msra.mxu0 0
    %697 = vmatprep.subr.bf16.mxu0 0
    %698 = vmatpush1.bf16.msra.mxu0 0
    %699 = vmatprep.subr.bf16.mxu0 0
    %700 = vmatpush1.bf16.msra.mxu0 0
    %701 = vmatprep.subr.bf16.mxu0 0
    %702 = vmatpush1.bf16.msra.mxu0 0
    %703 = vmatprep.mubr.bf16.mxu0 0
    %704 = vmatmul.mubr.bf16.gmra.mrb[0].mxu0 %v629
    %v705 = vpop.f32.mrb[0].mxu0
    %v706 = vadd.f32 0.0, %v705
    %v707 = vpop.f32.mrb[0].mxu0
    %v708 = vadd.f32 0.0, %v707
    %v709 = vpop.f32.mrb[0].mxu0
    %v710 = vpop.f32.mrb[0].mxu0
    %711 = vdwg.mxu0
    %v712 = vadd.f32 %v625, %v665
    %v713 = vadd.f32 %v626, %v667
    %v714 = vadd.f32 %v627, %v706
    %v715 = vadd.f32 %v628, %v708
    %v716 = vxor.u32 %v712, 2147483648
    %v717 = vxor.u32 %v713, 2147483648
    %v718 = vxor.u32 %v714, 2147483648
    %v719 = vmul.f32 %v716, 1.442695
    %v720 = vpow.pop %v719
    %v721 = vmul.f32 %v717, 1.442695
    %v722 = vpow.pop %v721
    %v723 = vmul.f32 %v718, 1.442695
    %v724 = vpow.pop %v723
    %v725 = vadd.f32 %v720, 1.0
    %v726 = vadd.f32 %v722, 1.0
    %v727 = vadd.f32 %v724, 1.0
    %v728 = vrcp.pop %v725
    %v729 = vmul.f32 1.0, %v728
    %v730 = vrcp.pop %v726
    %v731 = vmul.f32 1.0, %v730
    %v732 = vrcp.pop %v727
    %v733 = vmul.f32 1.0, %v732
    %v734 = vtanh.pop %v715
    %v735 = vmul.f32 %v731, %v621
    %v736 = vmul.f32 %v729, %v734
    %v737 = vadd.f32 %v735, %v736
    %v738 = vtanh.pop %v737
    %v739 = vmul.f32 %v733, %v738
    %s740 = scalar_lea.vmem [#allocation2], 64
    %v741 = vld [vmem:[%s740] sm:$0xff]
    %v742 = vld [vmem:[%s740 + $0x8] sm:$0xff]
    %v743 = vld [vmem:[%s740 + $0x10] sm:$0xff]
    %v744 = vld [vmem:[%s740 + $0x18] sm:$0xff]
    %v745 = vpack.c.bf16 %v739, %v739
    %746 = vmatprep.subr.bf16.mxu0 %v451
    %747 = vmatpush1.bf16.msra.mxu0 %v450
    %748 = vmatprep.subr.bf16.mxu0 %v455
    %749 = vmatpush1.bf16.msra.mxu0 %v454
    %750 = vmatprep.subr.bf16.mxu0 %v459
    %751 = vmatpush1.bf16.msra.mxu0 %v458
    %752 = vmatprep.subr.bf16.mxu0 %v463
    %753 = vmatpush1.bf16.msra.mxu0 %v462
    %754 = vmatprep.subr.bf16.mxu0 %v467
    %755 = vmatpush1.bf16.msra.mxu0 %v466
    %756 = vmatprep.subr.bf16.mxu0 %v471
    %757 = vmatpush1.bf16.msra.mxu0 %v470
    %758 = vmatprep.subr.bf16.mxu0 %v475
    %759 = vmatpush1.bf16.msra.mxu0 %v474
    %760 = vmatprep.subr.bf16.mxu0 %v479
    %761 = vmatpush1.bf16.msra.mxu0 %v478
    %762 = vmatprep.subr.bf16.mxu0 0
    %763 = vmatpush1.bf16.msra.mxu0 0
    %764 = vmatprep.subr.bf16.mxu0 0
    %765 = vmatpush1.bf16.msra.mxu0 0
    %766 = vmatprep.subr.bf16.mxu0 0
    %767 = vmatpush1.bf16.msra.mxu0 0
    %768 = vmatprep.subr.bf16.mxu0 0
    %769 = vmatpush1.bf16.msra.mxu0 0
    %770 = vmatprep.subr.bf16.mxu0 0
    %771 = vmatpush1.bf16.msra.mxu0 0
    %772 = vmatprep.subr.bf16.mxu0 0
    %773 = vmatpush1.bf16.msra.mxu0 0
    %774 = vmatprep.subr.bf16.mxu0 0
    %775 = vmatpush1.bf16.msra.mxu0 0
    %776 = vmatprep.subr.bf16.mxu0 0
    %777 = vmatpush1.bf16.msra.mxu0 0
    %778 = vmatprep.mubr.bf16.mxu0 0
    %779 = vmatmul.mubr.bf16.gmra.mrb[0].mxu0 %v745
    %v780 = vpop.f32.mrb[0].mxu0
    %v781 = vadd.f32 0.0, %v780
    %v782 = vpop.f32.mrb[0].mxu0
    %v783 = vadd.f32 0.0, %v782
    %v784 = vpop.f32.mrb[0].mxu0
    %v785 = vpop.f32.mrb[0].mxu0
    %786 = vdwg.mxu0
    %787 = vmatprep.subr.bf16.mxu0 %v453
    %788 = vmatpush1.bf16.msra.mxu0 %v452
    %789 = vmatprep.subr.bf16.mxu0 %v457
    %790 = vmatpush1.bf16.msra.mxu0 %v456
    %791 = vmatprep.subr.bf16.mxu0 %v461
    %792 = vmatpush1.bf16.msra.mxu0 %v460
    %793 = vmatprep.subr.bf16.mxu0 %v465
    %794 = vmatpush1.bf16.msra.mxu0 %v464
    %795 = vmatprep.subr.bf16.mxu0 %v469
    %796 = vmatpush1.bf16.msra.mxu0 %v468
    %797 = vmatprep.subr.bf16.mxu0 %v473
    %798 = vmatpush1.bf16.msra.mxu0 %v472
    %799 = vmatprep.subr.bf16.mxu0 %v477
    %800 = vmatpush1.bf16.msra.mxu0 %v476
    %801 = vmatprep.subr.bf16.mxu0 %v481
    %802 = vmatpush1.bf16.msra.mxu0 %v480
    %803 = vmatprep.subr.bf16.mxu0 0
    %804 = vmatpush1.bf16.msra.mxu0 0
    %805 = vmatprep.subr.bf16.mxu0 0
    %806 = vmatpush1.bf16.msra.mxu0 0
    %807 = vmatprep.subr.bf16.mxu0 0
    %808 = vmatpush1.bf16.msra.mxu0 0
    %809 = vmatprep.subr.bf16.mxu0 0
    %810 = vmatpush1.bf16.msra.mxu0 0
    %811 = vmatprep.subr.bf16.mxu0 0
    %812 = vmatpush1.bf16.msra.mxu0 0
    %813 = vmatprep.subr.bf16.mxu0 0
    %814 = vmatpush1.bf16.msra.mxu0 0
    %815 = vmatprep.subr.bf16.mxu0 0
    %816 = vmatpush1.bf16.msra.mxu0 0
    %817 = vmatprep.subr.bf16.mxu0 0
    %818 = vmatpush1.bf16.msra.mxu0 0
    %819 = vmatprep.mubr.bf16.mxu0 0
    %820 = vmatmul.mubr.bf16.gmra.mrb[0].mxu0 %v745
    %v821 = vpop.f32.mrb[0].mxu0
    %v822 = vadd.f32 0.0, %v821
    %v823 = vpop.f32.mrb[0].mxu0
    %v824 = vadd.f32 0.0, %v823
    %v825 = vpop.f32.mrb[0].mxu0
    %v826 = vpop.f32.mrb[0].mxu0
    %827 = vdwg.mxu0
    %v828 = vadd.f32 %v741, %v781
    %v829 = vadd.f32 %v742, %v783
    %v830 = vadd.f32 %v743, %v822
    %v831 = vadd.f32 %v744, %v824
    %v832 = vxor.u32 %v828, 2147483648
    %v833 = vxor.u32 %v829, 2147483648
    %v834 = vxor.u32 %v830, 2147483648
    %v835 = vmul.f32 %v832, 1.442695
    %v836 = vpow.pop %v835
    %v837 = vmul.f32 %v833, 1.442695
    %v838 = vpow.pop %v837
    %v839 = vmul.f32 %v834, 1.442695
    %v840 = vpow.pop %v839
    %v841 = vadd.f32 %v836, 1.0
    %v842 = vadd.f32 %v838, 1.0
    %v843 = vadd.f32 %v840, 1.0
    %v844 = vrcp.pop %v841
    %v845 = vmul.f32 1.0, %v844
    %v846 = vrcp.pop %v842
    %v847 = vmul.f32 1.0, %v846
    %v848 = vrcp.pop %v843
    %v849 = vmul.f32 1.0, %v848
    %v850 = vtanh.pop %v831
    %v851 = vmul.f32 %v847, %v737
    %v852 = vmul.f32 %v845, %v850
    %v853 = vadd.f32 %v851, %v852
    %v854 = vtanh.pop %v853
    %v855 = vmul.f32 %v849, %v854
    %s856 = scalar_lea.vmem [#allocation2], 96
    %v857 = vld [vmem:[%s856] sm:$0xff]
    %v858 = vld [vmem:[%s856 + $0x8] sm:$0xff]
    %v859 = vld [vmem:[%s856 + $0x10] sm:$0xff]
    %v860 = vld [vmem:[%s856 + $0x18] sm:$0xff]
    %v861 = vpack.c.bf16 %v855, %v855
    %862 = vmatprep.subr.bf16.mxu0 %v451
    %863 = vmatpush1.bf16.msra.mxu0 %v450
    %864 = vmatprep.subr.bf16.mxu0 %v455
    %865 = vmatpush1.bf16.msra.mxu0 %v454
    %866 = vmatprep.subr.bf16.mxu0 %v459
    %867 = vmatpush1.bf16.msra.mxu0 %v458
    %868 = vmatprep.subr.bf16.mxu0 %v463
    %869 = vmatpush1.bf16.msra.mxu0 %v462
    %870 = vmatprep.subr.bf16.mxu0 %v467
    %871 = vmatpush1.bf16.msra.mxu0 %v466
    %872 = vmatprep.subr.bf16.mxu0 %v471
    %873 = vmatpush1.bf16.msra.mxu0 %v470
    %874 = vmatprep.subr.bf16.mxu0 %v475
    %875 = vmatpush1.bf16.msra.mxu0 %v474
    %876 = vmatprep.subr.bf16.mxu0 %v479
    %877 = vmatpush1.bf16.msra.mxu0 %v478
    %878 = vmatprep.subr.bf16.mxu0 0
    %879 = vmatpush1.bf16.msra.mxu0 0
    %880 = vmatprep.subr.bf16.mxu0 0
    %881 = vmatpush1.bf16.msra.mxu0 0
    %882 = vmatprep.subr.bf16.mxu0 0
    %883 = vmatpush1.bf16.msra.mxu0 0
    %884 = vmatprep.subr.bf16.mxu0 0
    %885 = vmatpush1.bf16.msra.mxu0 0
    %886 = vmatprep.subr.bf16.mxu0 0
    %887 = vmatpush1.bf16.msra.mxu0 0
    %888 = vmatprep.subr.bf16.mxu0 0
    %889 = vmatpush1.bf16.msra.mxu0 0
    %890 = vmatprep.subr.bf16.mxu0 0
    %891 = vmatpush1.bf16.msra.mxu0 0
    %892 = vmatprep.subr.bf16.mxu0 0
    %893 = vmatpush1.bf16.msra.mxu0 0
    %894 = vmatprep.mubr.bf16.mxu0 0
    %895 = vmatmul.mubr.bf16.gmra.mrb[0].mxu0 %v861
    %v896 = vpop.f32.mrb[0].mxu0
    %v897 = vadd.f32 0.0, %v896
    %v898 = vpop.f32.mrb[0].mxu0
    %v899 = vadd.f32 0.0, %v898
    %v900 = vpop.f32.mrb[0].mxu0
    %v901 = vpop.f32.mrb[0].mxu0
    %902 = vdwg.mxu0
    %903 = vmatprep.subr.bf16.mxu0 %v453
    %904 = vmatpush1.bf16.msra.mxu0 %v452
    %905 = vmatprep.subr.bf16.mxu0 %v457
    %906 = vmatpush1.bf16.msra.mxu0 %v456
    %907 = vmatprep.subr.bf16.mxu0 %v461
    %908 = vmatpush1.bf16.msra.mxu0 %v460
    %909 = vmatprep.subr.bf16.mxu0 %v465
    %910 = vmatpush1.bf16.msra.mxu0 %v464
    %911 = vmatprep.subr.bf16.mxu0 %v469
    %912 = vmatpush1.bf16.msra.mxu0 %v468
    %913 = vmatprep.subr.bf16.mxu0 %v473
    %914 = vmatpush1.bf16.msra.mxu0 %v472
    %915 = vmatprep.subr.bf16.mxu0 %v477
    %916 = vmatpush1.bf16.msra.mxu0 %v476
    %917 = vmatprep.subr.bf16.mxu0 %v481
    %918 = vmatpush1.bf16.msra.mxu0 %v480
    %919 = vmatprep.subr.bf16.mxu0 0
    %920 = vmatpush1.bf16.msra.mxu0 0
    %921 = vmatprep.subr.bf16.mxu0 0
    %922 = vmatpush1.bf16.msra.mxu0 0
    %923 = vmatprep.subr.bf16.mxu0 0
    %924 = vmatpush1.bf16.msra.mxu0 0
    %925 = vmatprep.subr.bf16.mxu0 0
    %926 = vmatpush1.bf16.msra.mxu0 0
    %927 = vmatprep.subr.bf16.mxu0 0
    %928 = vmatpush1.bf16.msra.mxu0 0
    %929 = vmatprep.subr.bf16.mxu0 0
    %930 = vmatpush1.bf16.msra.mxu0 0
    %931 = vmatprep.subr.bf16.mxu0 0
    %932 = vmatpush1.bf16.msra.mxu0 0
    %933 = vmatprep.subr.bf16.mxu0 0
    %934 = vmatpush1.bf16.msra.mxu0 0
    %935 = vmatprep.mubr.bf16.mxu0 0
    %936 = vmatmul.mubr.bf16.gmra.mrb[0].mxu0 %v861
    %v937 = vpop.f32.mrb[0].mxu0
    %v938 = vadd.f32 0.0, %v937
    %v939 = vpop.f32.mrb[0].mxu0
    %v940 = vadd.f32 0.0, %v939
    %v941 = vpop.f32.mrb[0].mxu0
    %v942 = vpop.f32.mrb[0].mxu0
    %943 = vdwg.mxu0
    %v944 = vadd.f32 %v857, %v897
    %v945 = vadd.f32 %v858, %v899
    %v946 = vadd.f32 %v859, %v938
    %v947 = vadd.f32 %v860, %v940
    %v948 = vxor.u32 %v944, 2147483648
    %v949 = vxor.u32 %v945, 2147483648
    %v950 = vxor.u32 %v946, 2147483648
    %v951 = vmul.f32 %v948, 1.442695
    %v952 = vpow.pop %v951
    %v953 = vmul.f32 %v949, 1.442695
    %v954 = vpow.pop %v953
    %v955 = vmul.f32 %v950, 1.442695
    %v956 = vpow.pop %v955
    %v957 = vadd.f32 %v952, 1.0
    %v958 = vadd.f32 %v954, 1.0
    %v959 = vadd.f32 %v956, 1.0
    %v960 = vrcp.pop %v957
    %v961 = vmul.f32 1.0, %v960
    %v962 = vrcp.pop %v958
    %v963 = vmul.f32 1.0, %v962
    %v964 = vrcp.pop %v959
    %v965 = vmul.f32 1.0, %v964
    %v966 = vtanh.pop %v947
    %v967 = vmul.f32 %v963, %v853
    %v968 = vmul.f32 %v961, %v966
    %v969 = vadd.f32 %v967, %v968
    %v970 = vtanh.pop %v969
    %v971 = vmul.f32 %v965, %v970
    %s972 = scalar_lea.vmem [#allocation2], 128
    %v973 = vld [vmem:[%s972] sm:$0xff]
    %v974 = vld [vmem:[%s972 + $0x8] sm:$0xff]
    %v975 = vld [vmem:[%s972 + $0x10] sm:$0xff]
    %v976 = vld [vmem:[%s972 + $0x18] sm:$0xff]
    %v977 = vpack.c.bf16 %v971, %v971
    %978 = vmatprep.subr.bf16.mxu0 %v451
    %979 = vmatpush1.bf16.msra.mxu0 %v450
    %980 = vmatprep.subr.bf16.mxu0 %v455
    %981 = vmatpush1.bf16.msra.mxu0 %v454
    %982 = vmatprep.subr.bf16.mxu0 %v459
    %983 = vmatpush1.bf16.msra.mxu0 %v458
    %984 = vmatprep.subr.bf16.mxu0 %v463
    %985 = vmatpush1.bf16.msra.mxu0 %v462
    %986 = vmatprep.subr.bf16.mxu0 %v467
    %987 = vmatpush1.bf16.msra.mxu0 %v466
    %988 = vmatprep.subr.bf16.mxu0 %v471
    %989 = vmatpush1.bf16.msra.mxu0 %v470
    %990 = vmatprep.subr.bf16.mxu0 %v475
    %991 = vmatpush1.bf16.msra.mxu0 %v474
    %992 = vmatprep.subr.bf16.mxu0 %v479
    %993 = vmatpush1.bf16.msra.mxu0 %v478
    %994 = vmatprep.subr.bf16.mxu0 0
    %995 = vmatpush1.bf16.msra.mxu0 0
    %996 = vmatprep.subr.bf16.mxu0 0
    %997 = vmatpush1.bf16.msra.mxu0 0
    %998 = vmatprep.subr.bf16.mxu0 0
    %999 = vmatpush1.bf16.msra.mxu0 0
    %1000 = vmatprep.subr.bf16.mxu0 0
    %1001 = vmatpush1.bf16.msra.mxu0 0
    %1002 = vmatprep.subr.bf16.mxu0 0
    %1003 = vmatpush1.bf16.msra.mxu0 0
    %1004 = vmatprep.subr.bf16.mxu0 0
    %1005 = vmatpush1.bf16.msra.mxu0 0
    %1006 = vmatprep.subr.bf16.mxu0 0
    %1007 = vmatpush1.bf16.msra.mxu0 0
    %1008 = vmatprep.subr.bf16.mxu0 0
    %1009 = vmatpush1.bf16.msra.mxu0 0
    %1010 = vmatprep.mubr.bf16.mxu0 0
    %1011 = vmatmul.mubr.bf16.gmra.mrb[0].mxu0 %v977
    %v1012 = vpop.f32.mrb[0].mxu0
    %v1013 = vadd.f32 0.0, %v1012
    %v1014 = vpop.f32.mrb[0].mxu0
    %v1015 = vadd.f32 0.0, %v1014
    %v1016 = vpop.f32.mrb[0].mxu0
    %v1017 = vpop.f32.mrb[0].mxu0
    %1018 = vdwg.mxu0
    %1019 = vmatprep.subr.bf16.mxu0 %v453
    %1020 = vmatpush1.bf16.msra.mxu0 %v452
    %1021 = vmatprep.subr.bf16.mxu0 %v457
    %1022 = vmatpush1.bf16.msra.mxu0 %v456
    %1023 = vmatprep.subr.bf16.mxu0 %v461
    %1024 = vmatpush1.bf16.msra.mxu0 %v460
    %1025 = vmatprep.subr.bf16.mxu0 %v465
    %1026 = vmatpush1.bf16.msra.mxu0 %v464
    %1027 = vmatprep.subr.bf16.mxu0 %v469
    %1028 = vmatpush1.bf16.msra.mxu0 %v468
    %1029 = vmatprep.subr.bf16.mxu0 %v473
    %1030 = vmatpush1.bf16.msra.mxu0 %v472
    %1031 = vmatprep.subr.bf16.mxu0 %v477
    %1032 = vmatpush1.bf16.msra.mxu0 %v476
    %1033 = vmatprep.subr.bf16.mxu0 %v481
    %1034 = vmatpush1.bf16.msra.mxu0 %v480
    %1035 = vmatprep.subr.bf16.mxu0 0
    %1036 = vmatpush1.bf16.msra.mxu0 0
    %1037 = vmatprep.subr.bf16.mxu0 0
    %1038 = vmatpush1.bf16.msra.mxu0 0
    %1039 = vmatprep.subr.bf16.mxu0 0
    %1040 = vmatpush1.bf16.msra.mxu0 0
    %1041 = vmatprep.subr.bf16.mxu0 0
    %1042 = vmatpush1.bf16.msra.mxu0 0
    %1043 = vmatprep.subr.bf16.mxu0 0
    %1044 = vmatpush1.bf16.msra.mxu0 0
    %1045 = vmatprep.subr.bf16.mxu0 0
    %1046 = vmatpush1.bf16.msra.mxu0 0
    %1047 = vmatprep.subr.bf16.mxu0 0
    %1048 = vmatpush1.bf16.msra.mxu0 0
    %1049 = vmatprep.subr.bf16.mxu0 0
    %1050 = vmatpush1.bf16.msra.mxu0 0
    %1051 = vmatprep.mubr.bf16.mxu0 0
    %1052 = vmatmul.mubr.bf16.gmra.mrb[0].mxu0 %v977
    %v1053 = vpop.f32.mrb[0].mxu0
    %v1054 = vadd.f32 0.0, %v1053
    %v1055 = vpop.f32.mrb[0].mxu0
    %v1056 = vadd.f32 0.0, %v1055
    %v1057 = vpop.f32.mrb[0].mxu0
    %v1058 = vpop.f32.mrb[0].mxu0
    %1059 = vdwg.mxu0
    %v1060 = vadd.f32 %v973, %v1013
    %v1061 = vadd.f32 %v974, %v1015
    %v1062 = vadd.f32 %v975, %v1054
    %v1063 = vadd.f32 %v976, %v1056
    %v1064 = vxor.u32 %v1060, 2147483648
    %v1065 = vxor.u32 %v1061, 2147483648
    %v1066 = vxor.u32 %v1062, 2147483648
    %v1067 = vmul.f32 %v1064, 1.442695
    %v1068 = vpow.pop %v1067
    %v1069 = vmul.f32 %v1065, 1.442695
    %v1070 = vpow.pop %v1069
    %v1071 = vmul.f32 %v1066, 1.442695
    %v1072 = vpow.pop %v1071
    %v1073 = vadd.f32 %v1068, 1.0
    %v1074 = vadd.f32 %v1070, 1.0
    %v1075 = vadd.f32 %v1072, 1.0
    %v1076 = vrcp.pop %v1073
    %v1077 = vmul.f32 1.0, %v1076
    %v1078 = vrcp.pop %v1074
    %v1079 = vmul.f32 1.0, %v1078
    %v1080 = vrcp.pop %v1075
    %v1081 = vmul.f32 1.0, %v1080
    %v1082 = vtanh.pop %v1063
    %v1083 = vmul.f32 %v1079, %v969
    %v1084 = vmul.f32 %v1077, %v1082
    %v1085 = vadd.f32 %v1083, %v1084
    %v1086 = vtanh.pop %v1085
    %v1087 = vmul.f32 %v1081, %v1086
    %s1088 = scalar_lea.vmem [#allocation2], 160
    %v1089 = vld [vmem:[%s1088] sm:$0xff]
    %v1090 = vld [vmem:[%s1088 + $0x8] sm:$0xff]
    %v1091 = vld [vmem:[%s1088 + $0x10] sm:$0xff]
    %v1092 = vld [vmem:[%s1088 + $0x18] sm:$0xff]
    %v1093 = vpack.c.bf16 %v1087, %v1087
    %1094 = vmatprep.subr.bf16.mxu0 %v451
    %1095 = vmatpush1.bf16.msra.mxu0 %v450
    %1096 = vmatprep.subr.bf16.mxu0 %v455
    %1097 = vmatpush1.bf16.msra.mxu0 %v454
    %1098 = vmatprep.subr.bf16.mxu0 %v459
    %1099 = vmatpush1.bf16.msra.mxu0 %v458
    %1100 = vmatprep.subr.bf16.mxu0 %v463
    %1101 = vmatpush1.bf16.msra.mxu0 %v462
    %1102 = vmatprep.subr.bf16.mxu0 %v467
    %1103 = vmatpush1.bf16.msra.mxu0 %v466
    %1104 = vmatprep.subr.bf16.mxu0 %v471
    %1105 = vmatpush1.bf16.msra.mxu0 %v470
    %1106 = vmatprep.subr.bf16.mxu0 %v475
    %1107 = vmatpush1.bf16.msra.mxu0 %v474
    %1108 = vmatprep.subr.bf16.mxu0 %v479
    %1109 = vmatpush1.bf16.msra.mxu0 %v478
    %1110 = vmatprep.subr.bf16.mxu0 0
    %1111 = vmatpush1.bf16.msra.mxu0 0
    %1112 = vmatprep.subr.bf16.mxu0 0
    %1113 = vmatpush1.bf16.msra.mxu0 0
    %1114 = vmatprep.subr.bf16.mxu0 0
    %1115 = vmatpush1.bf16.msra.mxu0 0
    %1116 = vmatprep.subr.bf16.mxu0 0
    %1117 = vmatpush1.bf16.msra.mxu0 0
    %1118 = vmatprep.subr.bf16.mxu0 0
    %1119 = vmatpush1.bf16.msra.mxu0 0
    %1120 = vmatprep.subr.bf16.mxu0 0
    %1121 = vmatpush1.bf16.msra.mxu0 0
    %1122 = vmatprep.subr.bf16.mxu0 0
    %1123 = vmatpush1.bf16.msra.mxu0 0
    %1124 = vmatprep.subr.bf16.mxu0 0
    %1125 = vmatpush1.bf16.msra.mxu0 0
    %1126 = vmatprep.mubr.bf16.mxu0 0
    %1127 = vmatmul.mubr.bf16.gmra.mrb[0].mxu0 %v1093
    %v1128 = vpop.f32.mrb[0].mxu0
    %v1129 = vadd.f32 0.0, %v1128
    %v1130 = vpop.f32.mrb[0].mxu0
    %v1131 = vadd.f32 0.0, %v1130
    %v1132 = vpop.f32.mrb[0].mxu0
    %v1133 = vpop.f32.mrb[0].mxu0
    %1134 = vdwg.mxu0
    %1135 = vmatprep.subr.bf16.mxu0 %v453
    %1136 = vmatpush1.bf16.msra.mxu0 %v452
    %1137 = vmatprep.subr.bf16.mxu0 %v457
    %1138 = vmatpush1.bf16.msra.mxu0 %v456
    %1139 = vmatprep.subr.bf16.mxu0 %v461
    %1140 = vmatpush1.bf16.msra.mxu0 %v460
    %1141 = vmatprep.subr.bf16.mxu0 %v465
    %1142 = vmatpush1.bf16.msra.mxu0 %v464
    %1143 = vmatprep.subr.bf16.mxu0 %v469
    %1144 = vmatpush1.bf16.msra.mxu0 %v468
    %1145 = vmatprep.subr.bf16.mxu0 %v473
    %1146 = vmatpush1.bf16.msra.mxu0 %v472
    %1147 = vmatprep.subr.bf16.mxu0 %v477
    %1148 = vmatpush1.bf16.msra.mxu0 %v476
    %1149 = vmatprep.subr.bf16.mxu0 %v481
    %1150 = vmatpush1.bf16.msra.mxu0 %v480
    %1151 = vmatprep.subr.bf16.mxu0 0
    %1152 = vmatpush1.bf16.msra.mxu0 0
    %1153 = vmatprep.subr.bf16.mxu0 0
    %1154 = vmatpush1.bf16.msra.mxu0 0
    %1155 = vmatprep.subr.bf16.mxu0 0
    %1156 = vmatpush1.bf16.msra.mxu0 0
    %1157 = vmatprep.subr.bf16.mxu0 0
    %1158 = vmatpush1.bf16.msra.mxu0 0
    %1159 = vmatprep.subr.bf16.mxu0 0
    %1160 = vmatpush1.bf16.msra.mxu0 0
    %1161 = vmatprep.subr.bf16.mxu0 0
    %1162 = vmatpush1.bf16.msra.mxu0 0
    %1163 = vmatprep.subr.bf16.mxu0 0
    %1164 = vmatpush1.bf16.msra.mxu0 0
    %1165 = vmatprep.subr.bf16.mxu0 0
    %1166 = vmatpush1.bf16.msra.mxu0 0
    %1167 = vmatprep.mubr.bf16.mxu0 0
    %1168 = vmatmul.mubr.bf16.gmra.mrb[0].mxu0 %v1093
    %v1169 = vpop.f32.mrb[0].mxu0
    %v1170 = vadd.f32 0.0, %v1169
    %v1171 = vpop.f32.mrb[0].mxu0
    %v1172 = vadd.f32 0.0, %v1171
    %v1173 = vpop.f32.mrb[0].mxu0
    %v1174 = vpop.f32.mrb[0].mxu0
    %1175 = vdwg.mxu0
    %v1176 = vadd.f32 %v1089, %v1129
    %v1177 = vadd.f32 %v1090, %v1131
    %v1178 = vadd.f32 %v1091, %v1170
    %v1179 = vadd.f32 %v1092, %v1172
    %v1180 = vxor.u32 %v1176, 2147483648
    %v1181 = vxor.u32 %v1177, 2147483648
    %v1182 = vxor.u32 %v1178, 2147483648
    %v1183 = vmul.f32 %v1180, 1.442695
    %v1184 = vpow.pop %v1183
    %v1185 = vmul.f32 %v1181, 1.442695
    %v1186 = vpow.pop %v1185
    %v1187 = vmul.f32 %v1182, 1.442695
    %v1188 = vpow.pop %v1187
    %v1189 = vadd.f32 %v1184, 1.0
    %v1190 = vadd.f32 %v1186, 1.0
    %v1191 = vadd.f32 %v1188, 1.0
    %v1192 = vrcp.pop %v1189
    %v1193 = vmul.f32 1.0, %v1192
    %v1194 = vrcp.pop %v1190
    %v1195 = vmul.f32 1.0, %v1194
    %v1196 = vrcp.pop %v1191
    %v1197 = vmul.f32 1.0, %v1196
    %v1198 = vtanh.pop %v1179
    %v1199 = vmul.f32 %v1195, %v1085
    %v1200 = vmul.f32 %v1193, %v1198
    %v1201 = vadd.f32 %v1199, %v1200
    %v1202 = vtanh.pop %v1201
    %v1203 = vmul.f32 %v1197, %v1202
    %s1204 = scalar_lea.vmem [#allocation2], 192
    %v1205 = vld [vmem:[%s1204] sm:$0xff]
    %v1206 = vld [vmem:[%s1204 + $0x8] sm:$0xff]
    %v1207 = vld [vmem:[%s1204 + $0x10] sm:$0xff]
    %v1208 = vld [vmem:[%s1204 + $0x18] sm:$0xff]
    %v1209 = vpack.c.bf16 %v1203, %v1203
    %1210 = vmatprep.subr.bf16.mxu0 %v451
    %1211 = vmatpush1.bf16.msra.mxu0 %v450
    %1212 = vmatprep.subr.bf16.mxu0 %v455
    %1213 = vmatpush1.bf16.msra.mxu0 %v454
    %1214 = vmatprep.subr.bf16.mxu0 %v459
    %1215 = vmatpush1.bf16.msra.mxu0 %v458
    %1216 = vmatprep.subr.bf16.mxu0 %v463
    %1217 = vmatpush1.bf16.msra.mxu0 %v462
    %1218 = vmatprep.subr.bf16.mxu0 %v467
    %1219 = vmatpush1.bf16.msra.mxu0 %v466
    %1220 = vmatprep.subr.bf16.mxu0 %v471
    %1221 = vmatpush1.bf16.msra.mxu0 %v470
    %1222 = vmatprep.subr.bf16.mxu0 %v475
    %1223 = vmatpush1.bf16.msra.mxu0 %v474
    %1224 = vmatprep.subr.bf16.mxu0 %v479
    %1225 = vmatpush1.bf16.msra.mxu0 %v478
    %1226 = vmatprep.subr.bf16.mxu0 0
    %1227 = vmatpush1.bf16.msra.mxu0 0
    %1228 = vmatprep.subr.bf16.mxu0 0
    %1229 = vmatpush1.bf16.msra.mxu0 0
    %1230 = vmatprep.subr.bf16.mxu0 0
    %1231 = vmatpush1.bf16.msra.mxu0 0
    %1232 = vmatprep.subr.bf16.mxu0 0
    %1233 = vmatpush1.bf16.msra.mxu0 0
    %1234 = vmatprep.subr.bf16.mxu0 0
    %1235 = vmatpush1.bf16.msra.mxu0 0
    %1236 = vmatprep.subr.bf16.mxu0 0
    %1237 = vmatpush1.bf16.msra.mxu0 0
    %1238 = vmatprep.subr.bf16.mxu0 0
    %1239 = vmatpush1.bf16.msra.mxu0 0
    %1240 = vmatprep.subr.bf16.mxu0 0
    %1241 = vmatpush1.bf16.msra.mxu0 0
    %1242 = vmatprep.mubr.bf16.mxu0 0
    %1243 = vmatmul.mubr.bf16.gmra.mrb[0].mxu0 %v1209
    %v1244 = vpop.f32.mrb[0].mxu0
    %v1245 = vadd.f32 0.0, %v1244
    %v1246 = vpop.f32.mrb[0].mxu0
    %v1247 = vadd.f32 0.0, %v1246
    %v1248 = vpop.f32.mrb[0].mxu0
    %v1249 = vpop.f32.mrb[0].mxu0
    %1250 = vdwg.mxu0
    %1251 = vmatprep.subr.bf16.mxu0 %v453
    %1252 = vmatpush1.bf16.msra.mxu0 %v452
    %1253 = vmatprep.subr.bf16.mxu0 %v457
    %1254 = vmatpush1.bf16.msra.mxu0 %v456
    %1255 = vmatprep.subr.bf16.mxu0 %v461
    %1256 = vmatpush1.bf16.msra.mxu0 %v460
    %1257 = vmatprep.subr.bf16.mxu0 %v465
    %1258 = vmatpush1.bf16.msra.mxu0 %v464
    %1259 = vmatprep.subr.bf16.mxu0 %v469
    %1260 = vmatpush1.bf16.msra.mxu0 %v468
    %1261 = vmatprep.subr.bf16.mxu0 %v473
    %1262 = vmatpush1.bf16.msra.mxu0 %v472
    %1263 = vmatprep.subr.bf16.mxu0 %v477
    %1264 = vmatpush1.bf16.msra.mxu0 %v476
    %1265 = vmatprep.subr.bf16.mxu0 %v481
    %1266 = vmatpush1.bf16.msra.mxu0 %v480
    %1267 = vmatprep.subr.bf16.mxu0 0
    %1268 = vmatpush1.bf16.msra.mxu0 0
    %1269 = vmatprep.subr.bf16.mxu0 0
    %1270 = vmatpush1.bf16.msra.mxu0 0
    %1271 = vmatprep.subr.bf16.mxu0 0
    %1272 = vmatpush1.bf16.msra.mxu0 0
    %1273 = vmatprep.subr.bf16.mxu0 0
    %1274 = vmatpush1.bf16.msra.mxu0 0
    %1275 = vmatprep.subr.bf16.mxu0 0
    %1276 = vmatpush1.bf16.msra.mxu0 0
    %1277 = vmatprep.subr.bf16.mxu0 0
    %1278 = vmatpush1.bf16.msra.mxu0 0
    %1279 = vmatprep.subr.bf16.mxu0 0
    %1280 = vmatpush1.bf16.msra.mxu0 0
    %1281 = vmatprep.subr.bf16.mxu0 0
    %1282 = vmatpush1.bf16.msra.mxu0 0
    %1283 = vmatprep.mubr.bf16.mxu0 0
    %1284 = vmatmul.mubr.bf16.gmra.mrb[0].mxu0 %v1209
    %v1285 = vpop.f32.mrb[0].mxu0
    %v1286 = vadd.f32 0.0, %v1285
    %v1287 = vpop.f32.mrb[0].mxu0
    %v1288 = vadd.f32 0.0, %v1287
    %v1289 = vpop.f32.mrb[0].mxu0
    %v1290 = vpop.f32.mrb[0].mxu0
    %1291 = vdwg.mxu0
    %v1292 = vadd.f32 %v1205, %v1245
    %v1293 = vadd.f32 %v1206, %v1247
    %v1294 = vadd.f32 %v1207, %v1286
    %v1295 = vadd.f32 %v1208, %v1288
    %v1296 = vxor.u32 %v1292, 2147483648
    %v1297 = vxor.u32 %v1293, 2147483648
    %v1298 = vxor.u32 %v1294, 2147483648
    %v1299 = vmul.f32 %v1296, 1.442695
    %v1300 = vpow.pop %v1299
    %v1301 = vmul.f32 %v1297, 1.442695
    %v1302 = vpow.pop %v1301
    %v1303 = vmul.f32 %v1298, 1.442695
    %v1304 = vpow.pop %v1303
    %v1305 = vadd.f32 %v1300, 1.0
    %v1306 = vadd.f32 %v1302, 1.0
    %v1307 = vadd.f32 %v1304, 1.0
    %v1308 = vrcp.pop %v1305
    %v1309 = vmul.f32 1.0, %v1308
    %v1310 = vrcp.pop %v1306
    %v1311 = vmul.f32 1.0, %v1310
    %v1312 = vrcp.pop %v1307
    %v1313 = vmul.f32 1.0, %v1312
    %v1314 = vtanh.pop %v1295
    %v1315 = vmul.f32 %v1311, %v1201
    %v1316 = vmul.f32 %v1309, %v1314
    %v1317 = vadd.f32 %v1315, %v1316
    %v1318 = vtanh.pop %v1317
    %v1319 = vmul.f32 %v1313, %v1318
    %s1320 = scalar_lea.vmem [#allocation2], 224
    %v1321 = vld [vmem:[%s1320] sm:$0xff]
    %v1322 = vld [vmem:[%s1320 + $0x8] sm:$0xff]
    %v1323 = vld [vmem:[%s1320 + $0x10] sm:$0xff]
    %v1324 = vld [vmem:[%s1320 + $0x18] sm:$0xff]
    %v1325 = vpack.c.bf16 %v1319, %v1319
    %1326 = vmatprep.subr.bf16.mxu0 %v451
    %1327 = vmatpush1.bf16.msra.mxu0 %v450
    %1328 = vmatprep.subr.bf16.mxu0 %v455
    %1329 = vmatpush1.bf16.msra.mxu0 %v454
    %1330 = vmatprep.subr.bf16.mxu0 %v459
    %1331 = vmatpush1.bf16.msra.mxu0 %v458
    %1332 = vmatprep.subr.bf16.mxu0 %v463
    %1333 = vmatpush1.bf16.msra.mxu0 %v462
    %1334 = vmatprep.subr.bf16.mxu0 %v467
    %1335 = vmatpush1.bf16.msra.mxu0 %v466
    %1336 = vmatprep.subr.bf16.mxu0 %v471
    %1337 = vmatpush1.bf16.msra.mxu0 %v470
    %1338 = vmatprep.subr.bf16.mxu0 %v475
    %1339 = vmatpush1.bf16.msra.mxu0 %v474
    %1340 = vmatprep.subr.bf16.mxu0 %v479
    %1341 = vmatpush1.bf16.msra.mxu0 %v478
    %1342 = vmatprep.subr.bf16.mxu0 0
    %1343 = vmatpush1.bf16.msra.mxu0 0
    %1344 = vmatprep.subr.bf16.mxu0 0
    %1345 = vmatpush1.bf16.msra.mxu0 0
    %1346 = vmatprep.subr.bf16.mxu0 0
    %1347 = vmatpush1.bf16.msra.mxu0 0
    %1348 = vmatprep.subr.bf16.mxu0 0
    %1349 = vmatpush1.bf16.msra.mxu0 0
    %1350 = vmatprep.subr.bf16.mxu0 0
    %1351 = vmatpush1.bf16.msra.mxu0 0
    %1352 = vmatprep.subr.bf16.mxu0 0
    %1353 = vmatpush1.bf16.msra.mxu0 0
    %1354 = vmatprep.subr.bf16.mxu0 0
    %1355 = vmatpush1.bf16.msra.mxu0 0
    %1356 = vmatprep.subr.bf16.mxu0 0
    %1357 = vmatpush1.bf16.msra.mxu0 0
    %1358 = vmatprep.mubr.bf16.mxu0 0
    %1359 = vmatmul.mubr.bf16.gmra.mrb[0].mxu0 %v1325
    %v1360 = vpop.f32.mrb[0].mxu0
    %v1361 = vadd.f32 0.0, %v1360
    %v1362 = vpop.f32.mrb[0].mxu0
    %v1363 = vadd.f32 0.0, %v1362
    %v1364 = vpop.f32.mrb[0].mxu0
    %v1365 = vpop.f32.mrb[0].mxu0
    %1366 = vdwg.mxu0
    %1367 = vmatprep.subr.bf16.mxu0 %v453
    %1368 = vmatpush1.bf16.msra.mxu0 %v452
    %1369 = vmatprep.subr.bf16.mxu0 %v457
    %1370 = vmatpush1.bf16.msra.mxu0 %v456
    %1371 = vmatprep.subr.bf16.mxu0 %v461
    %1372 = vmatpush1.bf16.msra.mxu0 %v460
    %1373 = vmatprep.subr.bf16.mxu0 %v465
    %1374 = vmatpush1.bf16.msra.mxu0 %v464
    %1375 = vmatprep.subr.bf16.mxu0 %v469
    %1376 = vmatpush1.bf16.msra.mxu0 %v468
    %1377 = vmatprep.subr.bf16.mxu0 %v473
    %1378 = vmatpush1.bf16.msra.mxu0 %v472
    %1379 = vmatprep.subr.bf16.mxu0 %v477
    %1380 = vmatpush1.bf16.msra.mxu0 %v476
    %1381 = vmatprep.subr.bf16.mxu0 %v481
    %1382 = vmatpush1.bf16.msra.mxu0 %v480
    %1383 = vmatprep.subr.bf16.mxu0 0
    %1384 = vmatpush1.bf16.msra.mxu0 0
    %1385 = vmatprep.subr.bf16.mxu0 0
    %1386 = vmatpush1.bf16.msra.mxu0 0
    %1387 = vmatprep.subr.bf16.mxu0 0
    %1388 = vmatpush1.bf16.msra.mxu0 0
    %1389 = vmatprep.subr.bf16.mxu0 0
    %1390 = vmatpush1.bf16.msra.mxu0 0
    %1391 = vmatprep.subr.bf16.mxu0 0
    %1392 = vmatpush1.bf16.msra.mxu0 0
    %1393 = vmatprep.subr.bf16.mxu0 0
    %1394 = vmatpush1.bf16.msra.mxu0 0
    %1395 = vmatprep.subr.bf16.mxu0 0
    %1396 = vmatpush1.bf16.msra.mxu0 0
    %1397 = vmatprep.subr.bf16.mxu0 0
    %1398 = vmatpush1.bf16.msra.mxu0 0
    %1399 = vmatprep.mubr.bf16.mxu0 0
    %1400 = vmatmul.mubr.bf16.gmra.mrb[0].mxu0 %v1325
    %v1401 = vpop.f32.mrb[0].mxu0
    %v1402 = vadd.f32 0.0, %v1401
    %v1403 = vpop.f32.mrb[0].mxu0
    %v1404 = vadd.f32 0.0, %v1403
    %v1405 = vpop.f32.mrb[0].mxu0
    %v1406 = vpop.f32.mrb[0].mxu0
    %1407 = vdwg.mxu0
    %v1408 = vadd.f32 %v1321, %v1361
    %v1409 = vadd.f32 %v1322, %v1363
    %v1410 = vadd.f32 %v1323, %v1402
    %v1411 = vadd.f32 %v1324, %v1404
    %v1412 = vxor.u32 %v1408, 2147483648
    %v1413 = vxor.u32 %v1409, 2147483648
    %v1414 = vxor.u32 %v1410, 2147483648
    %v1415 = vmul.f32 %v1412, 1.442695
    %v1416 = vpow.pop %v1415
    %v1417 = vmul.f32 %v1413, 1.442695
    %v1418 = vpow.pop %v1417
    %v1419 = vmul.f32 %v1414, 1.442695
    %v1420 = vpow.pop %v1419
    %v1421 = vadd.f32 %v1416, 1.0
    %v1422 = vadd.f32 %v1418, 1.0
    %v1423 = vadd.f32 %v1420, 1.0
    %v1424 = vrcp.pop %v1421
    %v1425 = vmul.f32 1.0, %v1424
    %v1426 = vrcp.pop %v1422
    %v1427 = vmul.f32 1.0, %v1426
    %v1428 = vrcp.pop %v1423
    %v1429 = vmul.f32 1.0, %v1428
    %v1430 = vtanh.pop %v1411
    %v1431 = vmul.f32 %v1427, %v1317
    %v1432 = vmul.f32 %v1425, %v1430
    %v1433 = vadd.f32 %v1431, %v1432
    %v1434 = vtanh.pop %v1433
    %v1435 = vmul.f32 %v1429, %v1434
    %v1436 = vpack.c.bf16 %v1435, %v1435
    %v1437 = vld [vmem:[#allocation6] sm:$0xf]
    %v1438 = vld [vmem:[#allocation6 + $0x4] sm:$0xf]
    %v1439 = vld [vmem:[#allocation6 + $0x8] sm:$0xf]
    %v1440 = vld [vmem:[#allocation6 + $0xc] sm:$0xf]
    %v1441 = vld [vmem:[#allocation6 + $0x10] sm:$0xf]
    %v1442 = vld [vmem:[#allocation6 + $0x14] sm:$0xf]
    %v1443 = vld [vmem:[#allocation6 + $0x18] sm:$0xf]
    %v1444 = vld [vmem:[#allocation6 + $0x1c] sm:$0xf]
    %v1445 = vld [vmem:[#allocation6 + $0x20] sm:$0xf]
    %v1446 = vld [vmem:[#allocation6 + $0x24] sm:$0xf]
    %v1447 = vld [vmem:[#allocation6 + $0x28] sm:$0xf]
    %v1448 = vld [vmem:[#allocation6 + $0x2c] sm:$0xf]
    %v1449 = vld [vmem:[#allocation6 + $0x30] sm:$0xf]
    %v1450 = vld [vmem:[#allocation6 + $0x34] sm:$0xf]
    %v1451 = vld [vmem:[#allocation6 + $0x38] sm:$0xf]
    %v1452 = vld [vmem:[#allocation6 + $0x3c] sm:$0xf]
    %v1453 = vld [vmem:[%s5] sm:$0x1]
    %v1455 = vlaneseq
    %v1456 = vshrl.u32 %v1455, 7
    %v1457 = vsub.s32 0, %v1456
    %v1458 = vrot.slane %v1453, %v1457
    %v1476 = vunpack.c.l.b16 %v1437
    %v1477 = vunpack.c.l.b16 %v1438
    %v1478 = vunpack.c.l.b16 %v1439
    %v1479 = vunpack.c.l.b16 %v1440
    %v1480 = vunpack.c.l.b16 %v1441
    %v1481 = vunpack.c.l.b16 %v1442
    %v1482 = vunpack.c.l.b16 %v1443
    %v1483 = vunpack.c.l.b16 %v1444
    %v1484 = vunpack.c.l.b16 %v1445
    %v1485 = vunpack.c.l.b16 %v1446
    %v1486 = vunpack.c.l.b16 %v1447
    %v1487 = vunpack.c.l.b16 %v1448
    %v1488 = vunpack.c.l.b16 %v1449
    %v1489 = vunpack.c.l.b16 %v1450
    %v1490 = vunpack.c.l.b16 %v1451
    %v1491 = vunpack.c.l.b16 %v1452
    %v1492 = vpack.c.b16 %v1477, %v1476
    %v1493 = vpack.c.b16 %v1479, %v1478
    %v1494 = vpack.c.b16 %v1481, %v1480
    %v1495 = vpack.c.b16 %v1483, %v1482
    %v1496 = vpack.c.b16 %v1485, %v1484
    %v1497 = vpack.c.b16 %v1487, %v1486
    %v1498 = vpack.c.b16 %v1489, %v1488
    %v1499 = vpack.c.b16 %v1491, %v1490
    %1508 = vmatprep.subr.bf16.mxu0 0
    %1509 = vmatpush1.bf16.msra.mxu0 %v1492
    %1510 = vmatprep.subr.bf16.mxu0 0
    %1511 = vmatpush1.bf16.msra.mxu0 %v1493
    %1512 = vmatprep.subr.bf16.mxu0 0
    %1513 = vmatpush1.bf16.msra.mxu0 %v1494
    %1514 = vmatprep.subr.bf16.mxu0 0
    %1515 = vmatpush1.bf16.msra.mxu0 %v1495
    %1516 = vmatprep.subr.bf16.mxu0 0
    %1517 = vmatpush1.bf16.msra.mxu0 %v1496
    %1518 = vmatprep.subr.bf16.mxu0 0
    %1519 = vmatpush1.bf16.msra.mxu0 %v1497
    %1520 = vmatprep.subr.bf16.mxu0 0
    %1521 = vmatpush1.bf16.msra.mxu0 %v1498
    %1522 = vmatprep.subr.bf16.mxu0 0
    %1523 = vmatpush1.bf16.msra.mxu0 %v1499
    %1524 = vmatprep.subr.bf16.mxu0 0
    %1525 = vmatpush1.bf16.msra.mxu0 0
    %1526 = vmatprep.subr.bf16.mxu0 0
    %1527 = vmatpush1.bf16.msra.mxu0 0
    %1528 = vmatprep.subr.bf16.mxu0 0
    %1529 = vmatpush1.bf16.msra.mxu0 0
    %1530 = vmatprep.subr.bf16.mxu0 0
    %1531 = vmatpush1.bf16.msra.mxu0 0
    %1532 = vmatprep.subr.bf16.mxu0 0
    %1533 = vmatpush1.bf16.msra.mxu0 0
    %1534 = vmatprep.subr.bf16.mxu0 0
    %1535 = vmatpush1.bf16.msra.mxu0 0
    %1536 = vmatprep.subr.bf16.mxu0 0
    %1537 = vmatpush1.bf16.msra.mxu0 0
    %1538 = vmatprep.subr.bf16.mxu0 0
    %1539 = vmatpush1.bf16.msra.mxu0 0
    %1540 = vmatprep.mubr.bf16.mxu0 0
    %1541 = vmatmul.mubr.bf16.gmra.mrb[0].mxu0 %v1436
    %v1542 = vpop.f32.mrb[0].mxu0
    %v1543 = vadd.f32 %v1458, %v1542
    %v1544 = vpop.f32.mrb[0].mxu0
    %v1545 = vpop.f32.mrb[0].mxu0
    %v1546 = vpop.f32.mrb[0].mxu0
    %1547 = vdwg.mxu0
    %1548 = vst [vmem:[#allocation8] sm:$0xff] %v1543
    // Predicated region
    $region34: #{tpu_custom_call.1} parent=1 // pred_check
      _
    $region35: #{tpu_custom_call.1} parent=1 // pred_check_branch
      %1550 = sbr.rel (0) target = $region37
    $region36: #{tpu_custom_call.1} parent=1 // pred_region
      %s1552 = ssub.s32 128, 128
      %1553 = vsyncadd [#allocation5], %s1552
      %s1555 = sshll.u32 [#allocation8], 4
      %s1556 = int_to_ptr.vmem [resolvable:$true] %s1555
      %1558 = dma.vmem_to_hbm [thread:$0]  %s1556, 128, %s6, [#allocation5]
    $region37: #{tpu_custom_call.1} parent=1 // pred_fallthru
      _
    // Predicated region
    $region38: #{tpu_custom_call.1} parent=1 // pred_check
      _
    $region39: #{tpu_custom_call.1} parent=1 // pred_check_branch
      %1560 = sbr.rel (0) target = $region41
    $region40: #{tpu_custom_call.1} parent=1 // pred_region
      %1561 = dma.done [#allocation5], 128
    $region41: #{tpu_custom_call.1} parent=1 // pred_fallthru
      _
    %1562 = vsyncpa [#allocation4], 1
    %1563 = vsyncpa [#allocation7], 1
    %1564 = vsyncpa [#allocation5], 1

</llo_original>
